<compile_context>
chip_gen: v6e
topology: v6e:2x2x1
jax: 0.10.0
libtpu: 0.0.40
codegen_flags: <defaults>
</compile_context>

<pallas_src>
import functools

import jax
import jax.numpy as jnp
from jax.experimental import pallas as pl
from jax.experimental.pallas import tpu as pltpu


C_IN = 256
C_HID = 128


def _round_up(x, m):
    return ((x + m - 1) // m) * m


def _opnet_kernel(x_ref, w1_ref, c1_ref, w2_ref, c2_ref,
                  w3s_ref, c3s_ref, w3a_ref, c3a_ref, w3w_ref, c3w_ref,
                  os_ref, oa_ref, ow_ref, *, bb):
    """Fused (conv1x1+BN+relu) x2 + three conv1x1 heads on (bb, C_IN, tn).

    x_ref  : (bb, C_IN, tn)      f32 input columns (cast to bf16 in-kernel)
    w*_ref : (Cout, Cin)         bf16 conv weights (BN scale folded in)
    c*_ref : (Cout, 1)           f32 folded biases
    o*_ref : (bb, num_angle, tn) per-head outputs
    """
    for r in range(bb):  # static unroll over batch rows in this block
        x = x_ref[r].astype(jnp.bfloat16)                            # (C_IN, tn)

        h = jnp.dot(w1_ref[...], x, preferred_element_type=jnp.float32)
        h = jnp.maximum(h + c1_ref[...], 0.0).astype(jnp.bfloat16)   # (C_HID, tn)

        h = jnp.dot(w2_ref[...], h, preferred_element_type=jnp.float32)
        h = jnp.maximum(h + c2_ref[...], 0.0).astype(jnp.bfloat16)   # (C_HID, tn)

        os_ref[r] = (jnp.dot(w3s_ref[...], h, preferred_element_type=jnp.float32)
                     + c3s_ref[...]).astype(os_ref.dtype)
        oa_ref[r] = (jnp.dot(w3a_ref[...], h, preferred_element_type=jnp.float32)
                     + c3a_ref[...]).astype(oa_ref.dtype)
        ow_ref[r] = (jnp.dot(w3w_ref[...], h, preferred_element_type=jnp.float32)
                     + c3w_ref[...]).astype(ow_ref.dtype)


def operation_net_forward(vp_features, kparams, num_angle, num_depth, *,
                          tn=2048, out_dtype=jnp.float32):
    """vp_features: (B, 256, num_seed, num_depth) float32.

    Returns dict with 'grasp_score_pred', 'grasp_angle_cls_pred',
    'grasp_width_pred', each (B, num_angle, num_seed, num_depth).
    """
    B, C, num_seed, nd = vp_features.shape
    assert C == C_IN and nd == num_depth
    N = num_seed * num_depth

    # Free reshape only; x stays f32 in HBM (cast happens inside the kernel).
    x = vp_features.reshape(B, C_IN, N)

    # Lane-dense point tile: as large as N allows, but capped so the grid has
    # >= 4 steps (keeps both v7x TensorCores busy).
    tn = min(tn, _round_up(N, 128))
    min_steps = 4
    if B * pl.cdiv(N, tn) < min_steps:
        want_tiles = -(-min_steps // B)  # ceil(min_steps / B)
        tn = max(128, min(tn, _round_up(pl.cdiv(N, want_tiles), 128)))
    n_tiles = pl.cdiv(N, tn)

    # When each batch row is a single tile, amortize per-step overhead by
    # processing several batch rows per step (keep >= 4 grid steps).
    bb = 1
    if n_tiles == 1:
        while (B % (bb * 2) == 0) and ((B // (bb * 2)) * n_tiles >= min_steps):
            bb *= 2

    grid = (B // bb, n_tiles)

    resident = lambda shape: pl.BlockSpec(shape, lambda b, j: (0,) * len(shape))
    head_spec = pl.BlockSpec((bb, num_angle, tn), lambda b, j: (b, 0, j))
    head_shape = jax.ShapeDtypeStruct((B, num_angle, N), out_dtype)

    o_score, o_angle, o_width = pl.pallas_call(
        functools.partial(_opnet_kernel, bb=bb),
        out_shape=(head_shape, head_shape, head_shape),
        grid=grid,
        in_specs=[
            pl.BlockSpec((bb, C_IN, tn), lambda b, j: (b, 0, j)),  # x (f32)
            resident((C_HID, C_IN)),     # w1 (BN1 folded), bf16
            resident((C_HID, 1)),        # c1, f32
            resident((C_HID, C_HID)),    # w2 (BN2 folded), bf16
            resident((C_HID, 1)),        # c2, f32
            resident((num_angle, C_HID)),  # w3 score head, bf16
            resident((num_angle, 1)),      # c3 score head, f32
            resident((num_angle, C_HID)),  # w3 angle head, bf16
            resident((num_angle, 1)),      # c3 angle head, f32
            resident((num_angle, C_HID)),  # w3 width head, bf16
            resident((num_angle, 1)),      # c3 width head, f32
        ],
        out_specs=[head_spec, head_spec, head_spec],
        compiler_params=pltpu.CompilerParams(
            dimension_semantics=("parallel", "parallel")),
    )(x,
      kparams["w1"], kparams["c1"],
      kparams["w2"], kparams["c2"],
      kparams["w3s"], kparams["c3s"],
      kparams["w3a"], kparams["c3a"],
      kparams["w3w"], kparams["c3w"])

    end_points = {}
    end_points['grasp_score_pred'] = o_score.reshape(B, num_angle, num_seed, num_depth)
    end_points['grasp_angle_cls_pred'] = o_angle.reshape(B, num_angle, num_seed, num_depth)
    end_points['grasp_width_pred'] = o_width.reshape(B, num_angle, num_seed, num_depth)
    return end_points


def init_params(key, num_angle):
    """Deterministic synthetic parameters, torch-module shaped."""
    C_OUT = 3 * num_angle
    ks = jax.random.split(key, 16)

    def conv_w(k, cout, cin):
        # torch Conv1d weight is (cout, cin, 1); keep (cout, cin).
        return jax.random.normal(k, (cout, cin), jnp.float32) / jnp.sqrt(cin)

    return dict(
        w1=conv_w(ks[0], C_HID, C_IN),
        b1=0.02 * jax.random.normal(ks[1], (C_HID,), jnp.float32),
        w2=conv_w(ks[2], C_HID, C_HID),
        b2=0.02 * jax.random.normal(ks[3], (C_HID,), jnp.float32),
        w3=conv_w(ks[4], C_OUT, C_HID),
        b3=0.02 * jax.random.normal(ks[5], (C_OUT,), jnp.float32),
        bn1_gamma=1.0 + 0.1 * jax.random.normal(ks[6], (C_HID,), jnp.float32),
        bn1_beta=0.1 * jax.random.normal(ks[7], (C_HID,), jnp.float32),
        bn1_mean=0.1 * jax.random.normal(ks[8], (C_HID,), jnp.float32),
        bn1_var=jnp.abs(1.0 + 0.1 * jax.random.normal(ks[9], (C_HID,), jnp.float32)),
        bn2_gamma=1.0 + 0.1 * jax.random.normal(ks[10], (C_HID,), jnp.float32),
        bn2_beta=0.1 * jax.random.normal(ks[11], (C_HID,), jnp.float32),
        bn2_mean=0.1 * jax.random.normal(ks[12], (C_HID,), jnp.float32),
        bn2_var=jnp.abs(1.0 + 0.1 * jax.random.normal(ks[13], (C_HID,), jnp.float32)),
    )


def fold_params(p, eps=1e-5):
    """One-time fold of eval-mode BatchNorm into conv weights/biases (bf16 W).

    Also splits conv3 into the three per-head weight/bias blocks so the kernel
    can write score / angle / width directly (no post-kernel slicing pass).
    """
    # TODO(synk): training-mode BatchNorm (batch statistics) not implemented.
    def fold(w, b, gamma, beta, mean, var):
        s = gamma / jnp.sqrt(var + eps)                                 # (Cout,)
        wf = (w * s[:, None]).astype(jnp.bfloat16)                      # bf16
        cf = (b * s + (beta - mean * s)).astype(jnp.float32)[:, None]   # (Cout,1)
        return wf, cf

    w1, c1 = fold(p["w1"], p["b1"], p["bn1_gamma"], p["bn1_beta"],
                  p["bn1_mean"], p["bn1_var"])
    w2, c2 = fold(p["w2"], p["b2"], p["bn2_gamma"], p["bn2_beta"],
                  p["bn2_mean"], p["bn2_var"])

    w3 = p["w3"].astype(jnp.bfloat16)
    c3 = p["b3"].astype(jnp.float32)[:, None]
    A = w3.shape[0] // 3
    return dict(
        w1=w1, c1=c1, w2=w2, c2=c2,
        w3s=w3[0:A], c3s=c3[0:A],
        w3a=w3[A:2 * A], c3a=c3[A:2 * A],
        w3w=w3[2 * A:3 * A], c3w=c3[2 * A:3 * A],
    )


def _reference(vp_features, kparams, num_angle, num_depth):
    """Pure-JAX reference of the exact fused math (same bf16 rounding points)."""
    B, C, S, D = vp_features.shape
    hp = jax.lax.Precision.HIGHEST
    f32 = lambda a: a.astype(jnp.float32)

    w3 = jnp.concatenate([kparams["w3s"], kparams["w3a"], kparams["w3w"]], axis=0)
    c3 = jnp.concatenate([kparams["c3s"], kparams["c3a"], kparams["c3w"]], axis=0)

    x = f32(vp_features.reshape(B, C, S * D).astype(jnp.bfloat16))      # (B,256,N)
    h = jnp.maximum(
        jnp.einsum('oc,bcn->bon', f32(kparams["w1"]), x, precision=hp)
        + kparams["c1"][None], 0.0)
    h = f32(h.astype(jnp.bfloat16))
    h = jnp.maximum(
        jnp.einsum('oc,bcn->bon', f32(kparams["w2"]), h, precision=hp)
        + kparams["c2"][None], 0.0)
    h = f32(h.astype(jnp.bfloat16))
    o = (jnp.einsum('oc,bcn->bon', f32(w3), h, precision=hp) + c3[None])  # (B,3A,N)
    return o.reshape(B, 3 * num_angle, S, D)


if __name__ == "__main__":
    num_angle = 12          # 3 * num_angle = 36 output channels
    num_depth = 4
    B, num_seed = 2, 64     # N = num_seed * num_depth = 256 points

    key = jax.random.PRNGKey(0)
    kx, kp = jax.random.split(key)
    vp_features = jax.random.normal(
        kx, (B, C_IN, num_seed, num_depth), jnp.float32)
    kparams = fold_params(init_params(kp, num_angle))

    fwd = jax.jit(functools.partial(
        operation_net_forward, num_angle=num_angle, num_depth=num_depth))
    end_points = fwd(vp_features, kparams)
    jax.block_until_ready(end_points)

    got = jnp.concatenate(
        [end_points['grasp_score_pred'],
         end_points['grasp_angle_cls_pred'],
         end_points['grasp_width_pred']], axis=1)
    ref = _reference(vp_features, kparams, num_angle, num_depth)

    assert got.shape == (B, 3 * num_angle, num_seed, num_depth)
    assert got.dtype == jnp.float32
    err = float(jnp.max(jnp.abs(got - ref)))
    assert err < 2e-3, f"max abs err {err}"

    print("KERNEL_OK")
</pallas_src>

<mosaic_0001>
module attributes {stable_mosaic.version = 11 : i64} {
  func.func @_opnet_kernel(%arg0: i32, %arg1: i32, %arg2: memref<1x256x128xf32, #tpu.memory_space<vmem>>, %arg3: memref<128x256xbf16, #tpu.memory_space<vmem>>, %arg4: memref<128x1xf32, #tpu.memory_space<vmem>>, %arg5: memref<128x128xbf16, #tpu.memory_space<vmem>>, %arg6: memref<128x1xf32, #tpu.memory_space<vmem>>, %arg7: memref<12x128xbf16, #tpu.memory_space<vmem>>, %arg8: memref<12x1xf32, #tpu.memory_space<vmem>>, %arg9: memref<12x128xbf16, #tpu.memory_space<vmem>>, %arg10: memref<12x1xf32, #tpu.memory_space<vmem>>, %arg11: memref<12x128xbf16, #tpu.memory_space<vmem>>, %arg12: memref<12x1xf32, #tpu.memory_space<vmem>>, %arg13: memref<1x12x128xf32, #tpu.memory_space<vmem>>, %arg14: memref<1x12x128xf32, #tpu.memory_space<vmem>>, %arg15: memref<1x12x128xf32, #tpu.memory_space<vmem>>) attributes {dimension_semantics = [#tpu.dimension_semantics<parallel>, #tpu.dimension_semantics<parallel>], iteration_bounds = array<i64: 2, 2>, scalar_prefetch = 0 : i64, scratch_operands = 0 : i64, tpu.core_type = #tpu.core_type<tc>, window_params = [{transform_indices = @transform_0, window_bounds = array<i64: 1, 256, 128>}, {pipeline_mode = #tpu.pipeline_mode<synchronous>, transform_indices = @transform_1, window_bounds = array<i64: 128, 256>}, {pipeline_mode = #tpu.pipeline_mode<synchronous>, transform_indices = @transform_2, window_bounds = array<i64: 128, 1>}, {pipeline_mode = #tpu.pipeline_mode<synchronous>, transform_indices = @transform_3, window_bounds = array<i64: 128, 128>}, {pipeline_mode = #tpu.pipeline_mode<synchronous>, transform_indices = @transform_4, window_bounds = array<i64: 128, 1>}, {pipeline_mode = #tpu.pipeline_mode<synchronous>, transform_indices = @transform_5, window_bounds = array<i64: 12, 128>}, {pipeline_mode = #tpu.pipeline_mode<synchronous>, transform_indices = @transform_6, window_bounds = array<i64: 12, 1>}, {pipeline_mode = #tpu.pipeline_mode<synchronous>, transform_indices = @transform_7, window_bounds = array<i64: 12, 128>}, {pipeline_mode = #tpu.pipeline_mode<synchronous>, transform_indices = @transform_8, window_bounds = array<i64: 12, 1>}, {pipeline_mode = #tpu.pipeline_mode<synchronous>, transform_indices = @transform_9, window_bounds = array<i64: 12, 128>}, {pipeline_mode = #tpu.pipeline_mode<synchronous>, transform_indices = @transform_10, window_bounds = array<i64: 12, 1>}, {transform_indices = @transform_11, window_bounds = array<i64: 1, 12, 128>}, {transform_indices = @transform_12, window_bounds = array<i64: 1, 12, 128>}, {transform_indices = @transform_13, window_bounds = array<i64: 1, 12, 128>}]} {
    %c0 = arith.constant 0 : index
    %c0_0 = arith.constant 0 : index
    %c0_1 = arith.constant 0 : index
    %0 = vector.load %arg2[%c0, %c0_0, %c0_1] : memref<1x256x128xf32, #tpu.memory_space<vmem>>, vector<1x256x128xf32>
    %1 = vector.shape_cast %0 : vector<1x256x128xf32> to vector<256x128xf32>
    %2 = arith.truncf %1 : vector<256x128xf32> to vector<256x128xbf16>
    %c0_2 = arith.constant 0 : index
    %c0_3 = arith.constant 0 : index
    %3 = vector.load %arg3[%c0_2, %c0_3] : memref<128x256xbf16, #tpu.memory_space<vmem>>, vector<128x256xbf16>
    %cst = arith.constant dense<0.000000e+00> : vector<128x128xf32>
    %4 = tpu.matmul %3, %2, %cst {dimension_numbers = #tpu.dot_dimension_numbers<[1], [0], [0], [1], [0, 0, 1, 1], [], []>} : vector<128x256xbf16>, vector<256x128xbf16>, vector<128x128xf32> -> vector<128x128xf32>
    %c0_4 = arith.constant 0 : index
    %c0_5 = arith.constant 0 : index
    %5 = vector.load %arg4[%c0_4, %c0_5] : memref<128x1xf32, #tpu.memory_space<vmem>>, vector<128x1xf32>
    %6 = vector.broadcast %5 : vector<128x1xf32> to vector<128x128xf32>
    %7 = arith.addf %4, %6 : vector<128x128xf32>
    %cst_6 = arith.constant 0.000000e+00 : f32
    %8 = vector.broadcast %cst_6 : f32 to vector<128x128xf32>
    %9 = arith.maximumf %7, %8 : vector<128x128xf32>
    %10 = arith.truncf %9 : vector<128x128xf32> to vector<128x128xbf16>
    %c0_7 = arith.constant 0 : index
    %c0_8 = arith.constant 0 : index
    %11 = vector.load %arg5[%c0_7, %c0_8] : memref<128x128xbf16, #tpu.memory_space<vmem>>, vector<128x128xbf16>
    %cst_9 = arith.constant dense<0.000000e+00> : vector<128x128xf32>
    %12 = tpu.matmul %11, %10, %cst_9 {dimension_numbers = #tpu.dot_dimension_numbers<[1], [0], [0], [1], [0, 0, 1, 1], [], []>} : vector<128x128xbf16>, vector<128x128xbf16>, vector<128x128xf32> -> vector<128x128xf32>
    %c0_10 = arith.constant 0 : index
    %c0_11 = arith.constant 0 : index
    %13 = vector.load %arg6[%c0_10, %c0_11] : memref<128x1xf32, #tpu.memory_space<vmem>>, vector<128x1xf32>
    %14 = vector.broadcast %13 : vector<128x1xf32> to vector<128x128xf32>
    %15 = arith.addf %12, %14 : vector<128x128xf32>
    %cst_12 = arith.constant 0.000000e+00 : f32
    %16 = vector.broadcast %cst_12 : f32 to vector<128x128xf32>
    %17 = arith.maximumf %15, %16 : vector<128x128xf32>
    %18 = arith.truncf %17 : vector<128x128xf32> to vector<128x128xbf16>
    %c0_13 = arith.constant 0 : index
    %c0_14 = arith.constant 0 : index
    %19 = vector.load %arg7[%c0_13, %c0_14] : memref<12x128xbf16, #tpu.memory_space<vmem>>, vector<12x128xbf16>
    %cst_15 = arith.constant dense<0.000000e+00> : vector<12x128xf32>
    %20 = tpu.matmul %19, %18, %cst_15 {dimension_numbers = #tpu.dot_dimension_numbers<[1], [0], [0], [1], [0, 0, 1, 1], [], []>} : vector<12x128xbf16>, vector<128x128xbf16>, vector<12x128xf32> -> vector<12x128xf32>
    %c0_16 = arith.constant 0 : index
    %c0_17 = arith.constant 0 : index
    %21 = vector.load %arg8[%c0_16, %c0_17] : memref<12x1xf32, #tpu.memory_space<vmem>>, vector<12x1xf32>
    %22 = vector.broadcast %21 : vector<12x1xf32> to vector<12x128xf32>
    %23 = arith.addf %20, %22 : vector<12x128xf32>
    %c0_18 = arith.constant 0 : index
    %c0_19 = arith.constant 0 : index
    %c0_20 = arith.constant 0 : index
    %24 = vector.load %arg13[%c0_18, %c0_19, %c0_20] : memref<1x12x128xf32, #tpu.memory_space<vmem>>, vector<1x12x128xf32>
    %25 = vector.shape_cast %24 : vector<1x12x128xf32> to vector<12x128xf32>
    %26 = vector.shape_cast %23 : vector<12x128xf32> to vector<1x12x128xf32>
    tpu.vector_store %arg13[%c0_18, %c0_19, %c0_20], %26 {strides = array<i32>} : memref<1x12x128xf32, #tpu.memory_space<vmem>>, vector<1x12x128xf32>,
    %c0_21 = arith.constant 0 : index
    %c0_22 = arith.constant 0 : index
    %27 = vector.load %arg9[%c0_21, %c0_22] : memref<12x128xbf16, #tpu.memory_space<vmem>>, vector<12x128xbf16>
    %cst_23 = arith.constant dense<0.000000e+00> : vector<12x128xf32>
    %28 = tpu.matmul %27, %18, %cst_23 {dimension_numbers = #tpu.dot_dimension_numbers<[1], [0], [0], [1], [0, 0, 1, 1], [], []>} : vector<12x128xbf16>, vector<128x128xbf16>, vector<12x128xf32> -> vector<12x128xf32>
    %c0_24 = arith.constant 0 : index
    %c0_25 = arith.constant 0 : index
    %29 = vector.load %arg10[%c0_24, %c0_25] : memref<12x1xf32, #tpu.memory_space<vmem>>, vector<12x1xf32>
    %30 = vector.broadcast %29 : vector<12x1xf32> to vector<12x128xf32>
    %31 = arith.addf %28, %30 : vector<12x128xf32>
    %c0_26 = arith.constant 0 : index
    %c0_27 = arith.constant 0 : index
    %c0_28 = arith.constant 0 : index
    %32 = vector.load %arg14[%c0_26, %c0_27, %c0_28] : memref<1x12x128xf32, #tpu.memory_space<vmem>>, vector<1x12x128xf32>
    %33 = vector.shape_cast %32 : vector<1x12x128xf32> to vector<12x128xf32>
    %34 = vector.shape_cast %31 : vector<12x128xf32> to vector<1x12x128xf32>
    tpu.vector_store %arg14[%c0_26, %c0_27, %c0_28], %34 {strides = array<i32>} : memref<1x12x128xf32, #tpu.memory_space<vmem>>, vector<1x12x128xf32>,
    %c0_29 = arith.constant 0 : index
    %c0_30 = arith.constant 0 : index
    %35 = vector.load %arg11[%c0_29, %c0_30] : memref<12x128xbf16, #tpu.memory_space<vmem>>, vector<12x128xbf16>
    %cst_31 = arith.constant dense<0.000000e+00> : vector<12x128xf32>
    %36 = tpu.matmul %35, %18, %cst_31 {dimension_numbers = #tpu.dot_dimension_numbers<[1], [0], [0], [1], [0, 0, 1, 1], [], []>} : vector<12x128xbf16>, vector<128x128xbf16>, vector<12x128xf32> -> vector<12x128xf32>
    %c0_32 = arith.constant 0 : index
    %c0_33 = arith.constant 0 : index
    %37 = vector.load %arg12[%c0_32, %c0_33] : memref<12x1xf32, #tpu.memory_space<vmem>>, vector<12x1xf32>
    %38 = vector.broadcast %37 : vector<12x1xf32> to vector<12x128xf32>
    %39 = arith.addf %36, %38 : vector<12x128xf32>
    %c0_34 = arith.constant 0 : index
    %c0_35 = arith.constant 0 : index
    %c0_36 = arith.constant 0 : index
    %40 = vector.load %arg15[%c0_34, %c0_35, %c0_36] : memref<1x12x128xf32, #tpu.memory_space<vmem>>, vector<1x12x128xf32>
    %41 = vector.shape_cast %40 : vector<1x12x128xf32> to vector<12x128xf32>
    %42 = vector.shape_cast %39 : vector<12x128xf32> to vector<1x12x128xf32>
    tpu.vector_store %arg15[%c0_34, %c0_35, %c0_36], %42 {strides = array<i32>} : memref<1x12x128xf32, #tpu.memory_space<vmem>>, vector<1x12x128xf32>,
    return
  }
  func.func @transform_0(%arg0: i32, %arg1: i32) -> (i32, i32, i32) {
    %c0_i32 = arith.constant 0 : i32
    %c0_i32_0 = arith.constant 0 : i32
    return %arg0, %c0_i32, %arg1 : i32, i32, i32
  }
  func.func @transform_1(%arg0: i32, %arg1: i32) -> (i32, i32) {
    %c0_i32 = arith.constant 0 : i32
    %c0_i32_0 = arith.constant 0 : i32
    %c0_i32_1 = arith.constant 0 : i32
    return %c0_i32, %c0_i32_0 : i32, i32
  }
  func.func @transform_2(%arg0: i32, %arg1: i32) -> (i32, i32) {
    %c0_i32 = arith.constant 0 : i32
    %c0_i32_0 = arith.constant 0 : i32
    %c0_i32_1 = arith.constant 0 : i32
    return %c0_i32, %c0_i32_0 : i32, i32
  }
  func.func @transform_3(%arg0: i32, %arg1: i32) -> (i32, i32) {
    %c0_i32 = arith.constant 0 : i32
    %c0_i32_0 = arith.constant 0 : i32
    %c0_i32_1 = arith.constant 0 : i32
    return %c0_i32, %c0_i32_0 : i32, i32
  }
  func.func @transform_4(%arg0: i32, %arg1: i32) -> (i32, i32) {
    %c0_i32 = arith.constant 0 : i32
    %c0_i32_0 = arith.constant 0 : i32
    %c0_i32_1 = arith.constant 0 : i32
    return %c0_i32, %c0_i32_0 : i32, i32
  }
  func.func @transform_5(%arg0: i32, %arg1: i32) -> (i32, i32) {
    %c0_i32 = arith.constant 0 : i32
    %c0_i32_0 = arith.constant 0 : i32
    %c0_i32_1 = arith.constant 0 : i32
    return %c0_i32, %c0_i32_0 : i32, i32
  }
  func.func @transform_6(%arg0: i32, %arg1: i32) -> (i32, i32) {
    %c0_i32 = arith.constant 0 : i32
    %c0_i32_0 = arith.constant 0 : i32
    %c0_i32_1 = arith.constant 0 : i32
    return %c0_i32, %c0_i32_0 : i32, i32
  }
  func.func @transform_7(%arg0: i32, %arg1: i32) -> (i32, i32) {
    %c0_i32 = arith.constant 0 : i32
    %c0_i32_0 = arith.constant 0 : i32
    %c0_i32_1 = arith.constant 0 : i32
    return %c0_i32, %c0_i32_0 : i32, i32
  }
  func.func @transform_8(%arg0: i32, %arg1: i32) -> (i32, i32) {
    %c0_i32 = arith.constant 0 : i32
    %c0_i32_0 = arith.constant 0 : i32
    %c0_i32_1 = arith.constant 0 : i32
    return %c0_i32, %c0_i32_0 : i32, i32
  }
  func.func @transform_9(%arg0: i32, %arg1: i32) -> (i32, i32) {
    %c0_i32 = arith.constant 0 : i32
    %c0_i32_0 = arith.constant 0 : i32
    %c0_i32_1 = arith.constant 0 : i32
    return %c0_i32, %c0_i32_0 : i32, i32
  }
  func.func @transform_10(%arg0: i32, %arg1: i32) -> (i32, i32) {
    %c0_i32 = arith.constant 0 : i32
    %c0_i32_0 = arith.constant 0 : i32
    %c0_i32_1 = arith.constant 0 : i32
    return %c0_i32, %c0_i32_0 : i32, i32
  }
  func.func @transform_11(%arg0: i32, %arg1: i32) -> (i32, i32, i32) {
    %c0_i32 = arith.constant 0 : i32
    %c0_i32_0 = arith.constant 0 : i32
    return %arg0, %c0_i32, %arg1 : i32, i32, i32
  }
  func.func @transform_12(%arg0: i32, %arg1: i32) -> (i32, i32, i32) {
    %c0_i32 = arith.constant 0 : i32
    %c0_i32_0 = arith.constant 0 : i32
    return %arg0, %c0_i32, %arg1 : i32, i32, i32
  }
  func.func @transform_13(%arg0: i32, %arg1: i32) -> (i32, i32, i32) {
    %c0_i32 = arith.constant 0 : i32
    %c0_i32_0 = arith.constant 0 : i32
    return %arg0, %c0_i32, %arg1 : i32, i32, i32
  }
}

</mosaic_0001>

<llo_original>
// kernel: operation_net_forward.1
$region0: #{operation_net_forward.1}
  #allocation0 [shape = 'u32[]', space=smem, size = 0x4, offset = 0x4, fixed_abs, tag = 'smem constant byte address 0x4 - core index']
  #allocation1 [shape = 'u32[144,128]{1,0:T(1,128)}', space=vmem, size = 0x12000, scoped, tag = 'internal scratch']
  %s0 = inlined_call_operand.vmem [shape: f32[2,256,256], index: 0, kind: input, shape index: {}]
  %s1 = inlined_call_operand.vmem [shape: bf16[128,256], index: 1, kind: input, shape index: {}]
  %s2 = inlined_call_operand.vmem [shape: f32[128,1], index: 2, kind: input, shape index: {}]
  %s3 = inlined_call_operand.vmem [shape: bf16[128,128], index: 3, kind: input, shape index: {}]
  %s4 = inlined_call_operand.vmem [shape: f32[128,1], index: 4, kind: input, shape index: {}]
  %s5 = inlined_call_operand.vmem [shape: bf16[12,128], index: 5, kind: input, shape index: {}]
  %s6 = inlined_call_operand.vmem [shape: f32[12,1], index: 6, kind: input, shape index: {}]
  %s7 = inlined_call_operand.vmem [shape: bf16[12,128], index: 7, kind: input, shape index: {}]
  %s8 = inlined_call_operand.vmem [shape: f32[12,1], index: 8, kind: input, shape index: {}]
  %s9 = inlined_call_operand.vmem [shape: bf16[12,128], index: 9, kind: input, shape index: {}]
  %s10 = inlined_call_operand.vmem [shape: f32[12,1], index: 10, kind: input, shape index: {}]
  %s11 = inlined_call_operand.vmem [shape: f32[2,12,256], index: 11, kind: output, shape index: {0}]
  %s12 = inlined_call_operand.vmem [shape: f32[2,12,256], index: 12, kind: output, shape index: {1}]
  %s13 = inlined_call_operand.vmem [shape: f32[2,12,256], index: 13, kind: output, shape index: {2}]
  %14 = xla_tuple %s11, %s12, %s13
  %s15 = sld [smem:[#allocation0]]
  $region233: #{operation_net_forward.1} parent=0
    _
  %s17 = ssub.s32 1, %s15
  %s18 = scalar_select 0, %s17, %s15
  $region1: #{operation_net_forward.1} parent=0
    #allocation2 [shape = 'u8[262144]{0}', space=vmem, size = 0x40000, scoped, tag = 'input window, operand 0']
    #allocation3 [shape = 'u8[16384]{0}', space=vmem, size = 0x4000, scoped, tag = 'output window, operand 0']
    #allocation4 [shape = 'u8[16384]{0}', space=vmem, size = 0x4000, scoped, tag = 'output window, operand 1']
    #allocation5 [shape = 'u8[16384]{0}', space=vmem, size = 0x4000, scoped, tag = 'output window, operand 2']
    loop: start=0, step=1, limit=6
    $region2: #{operation_net_forward.1} parent=1 // loop_pre_header
      _
    $region3: #{operation_net_forward.1} parent=1 // loop_header
      %s20 = sphi 0, %s24
      %p21 = scmp.ge.s32.totalorder %s20, 6
      %s27 = sphi 0, %s39
      %s28 = sphi 0, %s35
      %s29 = sphi 0, %s27
      %s30 = sphi 0, %s28
      %s31 = sphi 0, %s29
      %s32 = sphi 0, %s30
      %s44 = sphi 0, %s46
      %s47 = sphi 0, %s44
      %s48 = sphi 0, %s47
      %s64 = sphi 0, %s48
      %s68 = sphi 0, %s68
      %s70 = sphi 0, %s68
      %s71 = sphi 0, %s70
      %s85 = sphi 0, %s71
      %s89 = sphi 0, %s89
      %s91 = sphi 0, %s89
      %s92 = sphi 0, %s91
      %s106 = sphi 0, %s92
      %s110 = sphi 0, %s110
      %s112 = sphi 0, %s110
      %s113 = sphi 0, %s112
      %s127 = sphi 0, %s113
      %s131 = sphi 0, %s131
      %s133 = sphi 0, %s131
      %s134 = sphi 0, %s133
      %s148 = sphi 0, %s134
      %s152 = sphi 0, %s152
      %s154 = sphi 0, %s152
      %s155 = sphi 0, %s154
      %s169 = sphi 0, %s155
      %s173 = sphi 0, %s173
      %s175 = sphi 0, %s173
      %s176 = sphi 0, %s175
      %s190 = sphi 0, %s176
      %s194 = sphi 0, %s194
      %s196 = sphi 0, %s194
      %s197 = sphi 0, %s196
      %s211 = sphi 0, %s197
      %s215 = sphi 0, %s215
      %s217 = sphi 0, %s215
      %s218 = sphi 0, %s217
      %s232 = sphi 0, %s218
      %s236 = sphi 0, %s236
      %s238 = sphi 0, %s236
      %s239 = sphi 0, %s238
      %s253 = sphi 0, %s239
      %s257 = sphi 0, %s257
      %s259 = sphi 0, %s257
      %s260 = sphi 0, %s259
      %s274 = sphi 0, %s260
      %s282 = sphi 0, %s284
      %s285 = sphi 0, %s282
      %s286 = sphi 0, %s285
      %s302 = sphi 0, %s286
      %s310 = sphi 0, %s312
      %s313 = sphi 0, %s310
      %s314 = sphi 0, %s313
      %s330 = sphi 0, %s314
      %s338 = sphi 0, %s340
      %s341 = sphi 0, %s338
      %s342 = sphi 0, %s341
      %s358 = sphi 0, %s342
    $region4: #{operation_net_forward.1} parent=1 // loop_header_branch
      %23 = sbr.rel (%p21) target = $region8
    $region5: #{operation_net_forward.1} parent=1 // loop_body
      %s25 = ssub.s32 %s20, 1
      %s26 = ssub.s32 %s20, 2
      %s33 = sadd.s32 1, %s28
      %p34 = scmp.ge.s32.totalorder %s33, 2
      %s35 = scalar_select %p34, 0, %s33
      %s36 = sadd.s32 1, %s27
      %s37 = scalar_select %p34, %s36, %s27
      %p38 = scmp.ge.s32.totalorder %s37, 2
      %s39 = scalar_select %p38, 0, %s37
      %s40 = ssub.s32 %s27, %s39
      %s41 = ssub.s32 %s28, %s35
      %s42 = sor.u32 %s40, %s41
      %p43 = scmp.eq.s32.totalorder %s42, 0
      %s45 = sadd.s32 %s44, 1
      %s46 = scalar_select %p43, %s44, %s45
      %p49 = pneg %p43
      %p50 = scmp.eq.s32.totalorder %s20, 3
      %p51 = por %p49, %p50
      %p52 = scmp.ne.s32.totalorder %s44, %s47
      %p53 = scmp.eq.s32.totalorder %s20, 0
      %p54 = por %p52, %p53
      %p55 = scmp.ne.s32.totalorder %s44, %s47
      %p56 = scmp.eq.s32.totalorder %s25, 3
      %p57 = por %p55, %p56
      %p58 = scmp.ne.s32.totalorder %s47, %s48
      %p59 = scmp.eq.s32.totalorder %s25, 0
      %p60 = por %p58, %p59
      %p61 = scmp.ne.s32.totalorder %s47, %s48
      %p62 = scmp.eq.s32.totalorder %s26, 3
      %p63 = por %p61, %p62
      %p65 = scmp.ne.s32.totalorder %s48, %s64
      %p66 = scmp.eq.s32.totalorder %s26, 0
      %p67 = por %p65, %p66
      %s69 = sadd.s32 %s68, 1
      %p72 = scmp.eq.s32.totalorder %s20, 3
      %p73 = scmp.ne.s32.totalorder %s68, %s70
      %p74 = scmp.eq.s32.totalorder %s20, 0
      %p75 = por %p73, %p74
      %p76 = scmp.ne.s32.totalorder %s68, %s70
      %p77 = scmp.eq.s32.totalorder %s25, 3
      %p78 = por %p76, %p77
      %p79 = scmp.ne.s32.totalorder %s70, %s71
      %p80 = scmp.eq.s32.totalorder %s25, 0
      %p81 = por %p79, %p80
      %p82 = scmp.ne.s32.totalorder %s70, %s71
      %p83 = scmp.eq.s32.totalorder %s26, 3
      %p84 = por %p82, %p83
      %p86 = scmp.ne.s32.totalorder %s71, %s85
      %p87 = scmp.eq.s32.totalorder %s26, 0
      %p88 = por %p86, %p87
      %s90 = sadd.s32 %s89, 1
      %p93 = scmp.eq.s32.totalorder %s20, 3
      %p94 = scmp.ne.s32.totalorder %s89, %s91
      %p95 = scmp.eq.s32.totalorder %s20, 0
      %p96 = por %p94, %p95
      %p97 = scmp.ne.s32.totalorder %s89, %s91
      %p98 = scmp.eq.s32.totalorder %s25, 3
      %p99 = por %p97, %p98
      %p100 = scmp.ne.s32.totalorder %s91, %s92
      %p101 = scmp.eq.s32.totalorder %s25, 0
      %p102 = por %p100, %p101
      %p103 = scmp.ne.s32.totalorder %s91, %s92
      %p104 = scmp.eq.s32.totalorder %s26, 3
      %p105 = por %p103, %p104
      %p107 = scmp.ne.s32.totalorder %s92, %s106
      %p108 = scmp.eq.s32.totalorder %s26, 0
      %p109 = por %p107, %p108
      %s111 = sadd.s32 %s110, 1
      %p114 = scmp.eq.s32.totalorder %s20, 3
      %p115 = scmp.ne.s32.totalorder %s110, %s112
      %p116 = scmp.eq.s32.totalorder %s20, 0
      %p117 = por %p115, %p116
      %p118 = scmp.ne.s32.totalorder %s110, %s112
      %p119 = scmp.eq.s32.totalorder %s25, 3
      %p120 = por %p118, %p119
      %p121 = scmp.ne.s32.totalorder %s112, %s113
      %p122 = scmp.eq.s32.totalorder %s25, 0
      %p123 = por %p121, %p122
      %p124 = scmp.ne.s32.totalorder %s112, %s113
      %p125 = scmp.eq.s32.totalorder %s26, 3
      %p126 = por %p124, %p125
      %p128 = scmp.ne.s32.totalorder %s113, %s127
      %p129 = scmp.eq.s32.totalorder %s26, 0
      %p130 = por %p128, %p129
      %s132 = sadd.s32 %s131, 1
      %p135 = scmp.eq.s32.totalorder %s20, 3
      %p136 = scmp.ne.s32.totalorder %s131, %s133
      %p137 = scmp.eq.s32.totalorder %s20, 0
      %p138 = por %p136, %p137
      %p139 = scmp.ne.s32.totalorder %s131, %s133
      %p140 = scmp.eq.s32.totalorder %s25, 3
      %p141 = por %p139, %p140
      %p142 = scmp.ne.s32.totalorder %s133, %s134
      %p143 = scmp.eq.s32.totalorder %s25, 0
      %p144 = por %p142, %p143
      %p145 = scmp.ne.s32.totalorder %s133, %s134
      %p146 = scmp.eq.s32.totalorder %s26, 3
      %p147 = por %p145, %p146
      %p149 = scmp.ne.s32.totalorder %s134, %s148
      %p150 = scmp.eq.s32.totalorder %s26, 0
      %p151 = por %p149, %p150
      %s153 = sadd.s32 %s152, 1
      %p156 = scmp.eq.s32.totalorder %s20, 3
      %p157 = scmp.ne.s32.totalorder %s152, %s154
      %p158 = scmp.eq.s32.totalorder %s20, 0
      %p159 = por %p157, %p158
      %p160 = scmp.ne.s32.totalorder %s152, %s154
      %p161 = scmp.eq.s32.totalorder %s25, 3
      %p162 = por %p160, %p161
      %p163 = scmp.ne.s32.totalorder %s154, %s155
      %p164 = scmp.eq.s32.totalorder %s25, 0
      %p165 = por %p163, %p164
      %p166 = scmp.ne.s32.totalorder %s154, %s155
      %p167 = scmp.eq.s32.totalorder %s26, 3
      %p168 = por %p166, %p167
      %p170 = scmp.ne.s32.totalorder %s155, %s169
      %p171 = scmp.eq.s32.totalorder %s26, 0
      %p172 = por %p170, %p171
      %s174 = sadd.s32 %s173, 1
      %p177 = scmp.eq.s32.totalorder %s20, 3
      %p178 = scmp.ne.s32.totalorder %s173, %s175
      %p179 = scmp.eq.s32.totalorder %s20, 0
      %p180 = por %p178, %p179
      %p181 = scmp.ne.s32.totalorder %s173, %s175
      %p182 = scmp.eq.s32.totalorder %s25, 3
      %p183 = por %p181, %p182
      %p184 = scmp.ne.s32.totalorder %s175, %s176
      %p185 = scmp.eq.s32.totalorder %s25, 0
      %p186 = por %p184, %p185
      %p187 = scmp.ne.s32.totalorder %s175, %s176
      %p188 = scmp.eq.s32.totalorder %s26, 3
      %p189 = por %p187, %p188
      %p191 = scmp.ne.s32.totalorder %s176, %s190
      %p192 = scmp.eq.s32.totalorder %s26, 0
      %p193 = por %p191, %p192
      %s195 = sadd.s32 %s194, 1
      %p198 = scmp.eq.s32.totalorder %s20, 3
      %p199 = scmp.ne.s32.totalorder %s194, %s196
      %p200 = scmp.eq.s32.totalorder %s20, 0
      %p201 = por %p199, %p200
      %p202 = scmp.ne.s32.totalorder %s194, %s196
      %p203 = scmp.eq.s32.totalorder %s25, 3
      %p204 = por %p202, %p203
      %p205 = scmp.ne.s32.totalorder %s196, %s197
      %p206 = scmp.eq.s32.totalorder %s25, 0
      %p207 = por %p205, %p206
      %p208 = scmp.ne.s32.totalorder %s196, %s197
      %p209 = scmp.eq.s32.totalorder %s26, 3
      %p210 = por %p208, %p209
      %p212 = scmp.ne.s32.totalorder %s197, %s211
      %p213 = scmp.eq.s32.totalorder %s26, 0
      %p214 = por %p212, %p213
      %s216 = sadd.s32 %s215, 1
      %p219 = scmp.eq.s32.totalorder %s20, 3
      %p220 = scmp.ne.s32.totalorder %s215, %s217
      %p221 = scmp.eq.s32.totalorder %s20, 0
      %p222 = por %p220, %p221
      %p223 = scmp.ne.s32.totalorder %s215, %s217
      %p224 = scmp.eq.s32.totalorder %s25, 3
      %p225 = por %p223, %p224
      %p226 = scmp.ne.s32.totalorder %s217, %s218
      %p227 = scmp.eq.s32.totalorder %s25, 0
      %p228 = por %p226, %p227
      %p229 = scmp.ne.s32.totalorder %s217, %s218
      %p230 = scmp.eq.s32.totalorder %s26, 3
      %p231 = por %p229, %p230
      %p233 = scmp.ne.s32.totalorder %s218, %s232
      %p234 = scmp.eq.s32.totalorder %s26, 0
      %p235 = por %p233, %p234
      %s237 = sadd.s32 %s236, 1
      %p240 = scmp.eq.s32.totalorder %s20, 3
      %p241 = scmp.ne.s32.totalorder %s236, %s238
      %p242 = scmp.eq.s32.totalorder %s20, 0
      %p243 = por %p241, %p242
      %p244 = scmp.ne.s32.totalorder %s236, %s238
      %p245 = scmp.eq.s32.totalorder %s25, 3
      %p246 = por %p244, %p245
      %p247 = scmp.ne.s32.totalorder %s238, %s239
      %p248 = scmp.eq.s32.totalorder %s25, 0
      %p249 = por %p247, %p248
      %p250 = scmp.ne.s32.totalorder %s238, %s239
      %p251 = scmp.eq.s32.totalorder %s26, 3
      %p252 = por %p250, %p251
      %p254 = scmp.ne.s32.totalorder %s239, %s253
      %p255 = scmp.eq.s32.totalorder %s26, 0
      %p256 = por %p254, %p255
      %s258 = sadd.s32 %s257, 1
      %p261 = scmp.eq.s32.totalorder %s20, 3
      %p262 = scmp.ne.s32.totalorder %s257, %s259
      %p263 = scmp.eq.s32.totalorder %s20, 0
      %p264 = por %p262, %p263
      %p265 = scmp.ne.s32.totalorder %s257, %s259
      %p266 = scmp.eq.s32.totalorder %s25, 3
      %p267 = por %p265, %p266
      %p268 = scmp.ne.s32.totalorder %s259, %s260
      %p269 = scmp.eq.s32.totalorder %s25, 0
      %p270 = por %p268, %p269
      %p271 = scmp.ne.s32.totalorder %s259, %s260
      %p272 = scmp.eq.s32.totalorder %s26, 3
      %p273 = por %p271, %p272
      %p275 = scmp.ne.s32.totalorder %s260, %s274
      %p276 = scmp.eq.s32.totalorder %s26, 0
      %p277 = por %p275, %p276
      %s278 = ssub.s32 %s27, %s39
      %s279 = ssub.s32 %s28, %s35
      %s280 = sor.u32 %s278, %s279
      %p281 = scmp.eq.s32.totalorder %s280, 0
      %s283 = sadd.s32 %s282, 1
      %s284 = scalar_select %p281, %s282, %s283
      %p287 = pneg %p281
      %p288 = scmp.eq.s32.totalorder %s20, 3
      %p289 = por %p287, %p288
      %p290 = scmp.ne.s32.totalorder %s282, %s285
      %p291 = scmp.eq.s32.totalorder %s20, 0
      %p292 = por %p290, %p291
      %p293 = scmp.ne.s32.totalorder %s282, %s285
      %p294 = scmp.eq.s32.totalorder %s25, 3
      %p295 = por %p293, %p294
      %p296 = scmp.ne.s32.totalorder %s285, %s286
      %p297 = scmp.eq.s32.totalorder %s25, 0
      %p298 = por %p296, %p297
      %p299 = scmp.ne.s32.totalorder %s285, %s286
      %p300 = scmp.eq.s32.totalorder %s26, 3
      %p301 = por %p299, %p300
      %p303 = scmp.ne.s32.totalorder %s286, %s302
      %p304 = scmp.eq.s32.totalorder %s26, 0
      %p305 = por %p303, %p304
      %s306 = ssub.s32 %s27, %s39
      %s307 = ssub.s32 %s28, %s35
      %s308 = sor.u32 %s306, %s307
      %p309 = scmp.eq.s32.totalorder %s308, 0
      %s311 = sadd.s32 %s310, 1
      %s312 = scalar_select %p309, %s310, %s311
      %p315 = pneg %p309
      %p316 = scmp.eq.s32.totalorder %s20, 3
      %p317 = por %p315, %p316
      %p318 = scmp.ne.s32.totalorder %s310, %s313
      %p319 = scmp.eq.s32.totalorder %s20, 0
      %p320 = por %p318, %p319
      %p321 = scmp.ne.s32.totalorder %s310, %s313
      %p322 = scmp.eq.s32.totalorder %s25, 3
      %p323 = por %p321, %p322
      %p324 = scmp.ne.s32.totalorder %s313, %s314
      %p325 = scmp.eq.s32.totalorder %s25, 0
      %p326 = por %p324, %p325
      %p327 = scmp.ne.s32.totalorder %s313, %s314
      %p328 = scmp.eq.s32.totalorder %s26, 3
      %p329 = por %p327, %p328
      %p331 = scmp.ne.s32.totalorder %s314, %s330
      %p332 = scmp.eq.s32.totalorder %s26, 0
      %p333 = por %p331, %p332
      %s334 = ssub.s32 %s27, %s39
      %s335 = ssub.s32 %s28, %s35
      %s336 = sor.u32 %s334, %s335
      %p337 = scmp.eq.s32.totalorder %s336, 0
      %s339 = sadd.s32 %s338, 1
      %s340 = scalar_select %p337, %s338, %s339
      %p343 = pneg %p337
      %p344 = scmp.eq.s32.totalorder %s20, 3
      %p345 = por %p343, %p344
      %p346 = scmp.ne.s32.totalorder %s338, %s341
      %p347 = scmp.eq.s32.totalorder %s20, 0
      %p348 = por %p346, %p347
      %p349 = scmp.ne.s32.totalorder %s338, %s341
      %p350 = scmp.eq.s32.totalorder %s25, 3
      %p351 = por %p349, %p350
      %p352 = scmp.ne.s32.totalorder %s341, %s342
      %p353 = scmp.eq.s32.totalorder %s25, 0
      %p354 = por %p352, %p353
      %p355 = scmp.ne.s32.totalorder %s341, %s342
      %p356 = scmp.eq.s32.totalorder %s26, 3
      %p357 = por %p355, %p356
      %p359 = scmp.ne.s32.totalorder %s342, %s358
      %p360 = scmp.eq.s32.totalorder %s26, 0
      %p361 = por %p359, %p360
      %p362 = scmp.le.s32.totalorder 1, %s20
      %p363 = scmp.lt.s32.totalorder %s20, 5
      %p364 = pnand %p362, %p363
      %p365 = pneg %p364
      // Predicated region
      $region9: #{operation_net_forward.1} parent=5 // pred_check
        _
      $region10: #{operation_net_forward.1} parent=5 // pred_check_branch
        %367 = sbr.rel (%p364) target = $region12
      $region11: #{operation_net_forward.1} parent=5 // pred_region
        %s368 = ssub.s32 %s20, 1
        // Predicated region
        $region13: #{operation_net_forward.1} parent=11 // pred_check
          %p369 = pneg %p81
        $region14: #{operation_net_forward.1} parent=11 // pred_check_branch
          %371 = sbr.rel (%p369) target = $region16
        $region15: #{operation_net_forward.1} parent=11 // pred_region
          _
        $region16: #{operation_net_forward.1} parent=11 // pred_fallthru
          _
        // Predicated region
        $region17: #{operation_net_forward.1} parent=11 // pred_check
          %p372 = pneg %p102
        $region18: #{operation_net_forward.1} parent=11 // pred_check_branch
          %374 = sbr.rel (%p372) target = $region20
        $region19: #{operation_net_forward.1} parent=11 // pred_region
          _
        $region20: #{operation_net_forward.1} parent=11 // pred_fallthru
          _
        // Predicated region
        $region21: #{operation_net_forward.1} parent=11 // pred_check
          %p375 = pneg %p123
        $region22: #{operation_net_forward.1} parent=11 // pred_check_branch
          %377 = sbr.rel (%p375) target = $region24
        $region23: #{operation_net_forward.1} parent=11 // pred_region
          _
        $region24: #{operation_net_forward.1} parent=11 // pred_fallthru
          _
        // Predicated region
        $region25: #{operation_net_forward.1} parent=11 // pred_check
          %p378 = pneg %p144
        $region26: #{operation_net_forward.1} parent=11 // pred_check_branch
          %380 = sbr.rel (%p378) target = $region28
        $region27: #{operation_net_forward.1} parent=11 // pred_region
          _
        $region28: #{operation_net_forward.1} parent=11 // pred_fallthru
          _
        // Predicated region
        $region29: #{operation_net_forward.1} parent=11 // pred_check
          %p381 = pneg %p165
        $region30: #{operation_net_forward.1} parent=11 // pred_check_branch
          %383 = sbr.rel (%p381) target = $region32
        $region31: #{operation_net_forward.1} parent=11 // pred_region
          _
        $region32: #{operation_net_forward.1} parent=11 // pred_fallthru
          _
        // Predicated region
        $region33: #{operation_net_forward.1} parent=11 // pred_check
          %p384 = pneg %p186
        $region34: #{operation_net_forward.1} parent=11 // pred_check_branch
          %386 = sbr.rel (%p384) target = $region36
        $region35: #{operation_net_forward.1} parent=11 // pred_region
          _
        $region36: #{operation_net_forward.1} parent=11 // pred_fallthru
          _
        // Predicated region
        $region37: #{operation_net_forward.1} parent=11 // pred_check
          %p387 = pneg %p207
        $region38: #{operation_net_forward.1} parent=11 // pred_check_branch
          %389 = sbr.rel (%p387) target = $region40
        $region39: #{operation_net_forward.1} parent=11 // pred_region
          _
        $region40: #{operation_net_forward.1} parent=11 // pred_fallthru
          _
        // Predicated region
        $region41: #{operation_net_forward.1} parent=11 // pred_check
          %p390 = pneg %p228
        $region42: #{operation_net_forward.1} parent=11 // pred_check_branch
          %392 = sbr.rel (%p390) target = $region44
        $region43: #{operation_net_forward.1} parent=11 // pred_region
          _
        $region44: #{operation_net_forward.1} parent=11 // pred_fallthru
          _
        // Predicated region
        $region45: #{operation_net_forward.1} parent=11 // pred_check
          %p393 = pneg %p249
        $region46: #{operation_net_forward.1} parent=11 // pred_check_branch
          %395 = sbr.rel (%p393) target = $region48
        $region47: #{operation_net_forward.1} parent=11 // pred_region
          _
        $region48: #{operation_net_forward.1} parent=11 // pred_fallthru
          _
        // Predicated region
        $region49: #{operation_net_forward.1} parent=11 // pred_check
          %p396 = pneg %p270
        $region50: #{operation_net_forward.1} parent=11 // pred_check_branch
          %398 = sbr.rel (%p396) target = $region52
        $region51: #{operation_net_forward.1} parent=11 // pred_region
          _
        $region52: #{operation_net_forward.1} parent=11 // pred_fallthru
          _
      $region12: #{operation_net_forward.1} parent=5 // pred_fallthru
        _
      %p399 = scmp.lt.s32.totalorder %s20, 4
      // Predicated region
      $region53: #{operation_net_forward.1} parent=5 // pred_check
        %p400 = pneg %p399
      $region54: #{operation_net_forward.1} parent=5 // pred_check_branch
        %402 = sbr.rel (%p400) target = $region56
      $region55: #{operation_net_forward.1} parent=5 // pred_region
        // Predicated region
        $region57: #{operation_net_forward.1} parent=55 // pred_check
          %p403 = pneg %p54
        $region58: #{operation_net_forward.1} parent=55 // pred_check_branch
          %405 = sbr.rel (%p403) target = $region60
        $region59: #{operation_net_forward.1} parent=55 // pred_region
          %s406 = sand.u32 %s44, 1
          %s407 = sand.u32 %s44, 1
          %s408 = smul.addr %s407, 256
          %s409 = scalar_lea.vmem [#allocation2], %s408
          %s410 = smul.addr %s27, 64
          %s411 = sadd.s32 %s28, %s410
          %s412 = smul.addr %s411, 8
          %s413 = scalar_lea.vmem %s0, %s412
          // Predicated region
          $region61: #{operation_net_forward.1} parent=59 // pred_check
            _
          $region62: #{operation_net_forward.1} parent=59 // pred_check_branch
            %415 = sbr.rel (0) target = $region64
          $region63: #{operation_net_forward.1} parent=59 // pred_region
            // Predicated region
            $region65: #{operation_net_forward.1} parent=63 // pred_check
              _
            $region66: #{operation_net_forward.1} parent=63 // pred_check_branch
              %417 = sbr.rel (0) target = $region68
            $region67: #{operation_net_forward.1} parent=63 // pred_region
              // Predicated region
              $region80: #{operation_net_forward.1} parent=67 // pred_check
                _
              $region81: #{operation_net_forward.1} parent=67 // pred_check_branch
                %495 = sbr.rel (0) target = $region83
              $region82: #{operation_net_forward.1} parent=67 // pred_region
                loop: start=0, step=1, limit=1
                $region84: #{operation_net_forward.1} parent=82 // loop_pre_header
                  _
                $region85: #{operation_net_forward.1} parent=82 // loop_header
                  %s497 = sphi 0, %s501
                  %p498 = scmp.ge.s32.totalorder %s497, 1
                  %s502 = sphi %s413, %s413
                  %s503 = sphi %s409, %s409
                $region86: #{operation_net_forward.1} parent=82 // loop_header_branch
                  %500 = sbr.rel (%p498) target = $region90
                $region87: #{operation_net_forward.1} parent=82 // loop_body
                  %v504 = vld [vmem:[%s502] sm:$0xff]
                  %505 = vst [vmem:[%s503] sm:$0xff] %v504
                  %v506 = vld [vmem:[%s502 + $0x10] sm:$0xff]
                  %507 = vst [vmem:[%s503 + $0x8] sm:$0xff] %v506
                  %v508 = vld [vmem:[%s502 + $0x20] sm:$0xff]
                  %509 = vst [vmem:[%s503 + $0x10] sm:$0xff] %v508
                  %v510 = vld [vmem:[%s502 + $0x30] sm:$0xff]
                  %511 = vst [vmem:[%s503 + $0x18] sm:$0xff] %v510
                  %v512 = vld [vmem:[%s502 + $0x40] sm:$0xff]
                  %513 = vst [vmem:[%s503 + $0x20] sm:$0xff] %v512
                  %v514 = vld [vmem:[%s502 + $0x50] sm:$0xff]
                  %515 = vst [vmem:[%s503 + $0x28] sm:$0xff] %v514
                  %v516 = vld [vmem:[%s502 + $0x60] sm:$0xff]
                  %517 = vst [vmem:[%s503 + $0x30] sm:$0xff] %v516
                  %v518 = vld [vmem:[%s502 + $0x70] sm:$0xff]
                  %519 = vst [vmem:[%s503 + $0x38] sm:$0xff] %v518
                  %v520 = vld [vmem:[%s502 + $0x80] sm:$0xff]
                  %521 = vst [vmem:[%s503 + $0x40] sm:$0xff] %v520
                  %v522 = vld [vmem:[%s502 + $0x90] sm:$0xff]
                  %523 = vst [vmem:[%s503 + $0x48] sm:$0xff] %v522
                  %v524 = vld [vmem:[%s502 + $0xa0] sm:$0xff]
                  %525 = vst [vmem:[%s503 + $0x50] sm:$0xff] %v524
                  %v526 = vld [vmem:[%s502 + $0xb0] sm:$0xff]
                  %527 = vst [vmem:[%s503 + $0x58] sm:$0xff] %v526
                  %v528 = vld [vmem:[%s502 + $0xc0] sm:$0xff]
                  %529 = vst [vmem:[%s503 + $0x60] sm:$0xff] %v528
                  %v530 = vld [vmem:[%s502 + $0xd0] sm:$0xff]
                  %531 = vst [vmem:[%s503 + $0x68] sm:$0xff] %v530
                  %v532 = vld [vmem:[%s502 + $0xe0] sm:$0xff]
                  %533 = vst [vmem:[%s503 + $0x70] sm:$0xff] %v532
                  %v534 = vld [vmem:[%s502 + $0xf0] sm:$0xff]
                  %535 = vst [vmem:[%s503 + $0x78] sm:$0xff] %v534
                  %v536 = vld [vmem:[%s502 + $0x100] sm:$0xff]
                  %537 = vst [vmem:[%s503 + $0x80] sm:$0xff] %v536
                  %v538 = vld [vmem:[%s502 + $0x110] sm:$0xff]
                  %539 = vst [vmem:[%s503 + $0x88] sm:$0xff] %v538
                  %v540 = vld [vmem:[%s502 + $0x120] sm:$0xff]
                  %541 = vst [vmem:[%s503 + $0x90] sm:$0xff] %v540
                  %v542 = vld [vmem:[%s502 + $0x130] sm:$0xff]
                  %543 = vst [vmem:[%s503 + $0x98] sm:$0xff] %v542
                  %v544 = vld [vmem:[%s502 + $0x140] sm:$0xff]
                  %545 = vst [vmem:[%s503 + $0xa0] sm:$0xff] %v544
                  %v546 = vld [vmem:[%s502 + $0x150] sm:$0xff]
                  %547 = vst [vmem:[%s503 + $0xa8] sm:$0xff] %v546
                  %v548 = vld [vmem:[%s502 + $0x160] sm:$0xff]
                  %549 = vst [vmem:[%s503 + $0xb0] sm:$0xff] %v548
                  %v550 = vld [vmem:[%s502 + $0x170] sm:$0xff]
                  %551 = vst [vmem:[%s503 + $0xb8] sm:$0xff] %v550
                  %v552 = vld [vmem:[%s502 + $0x180] sm:$0xff]
                  %553 = vst [vmem:[%s503 + $0xc0] sm:$0xff] %v552
                  %v554 = vld [vmem:[%s502 + $0x190] sm:$0xff]
                  %555 = vst [vmem:[%s503 + $0xc8] sm:$0xff] %v554
                  %v556 = vld [vmem:[%s502 + $0x1a0] sm:$0xff]
                  %557 = vst [vmem:[%s503 + $0xd0] sm:$0xff] %v556
                  %v558 = vld [vmem:[%s502 + $0x1b0] sm:$0xff]
                  %559 = vst [vmem:[%s503 + $0xd8] sm:$0xff] %v558
                  %v560 = vld [vmem:[%s502 + $0x1c0] sm:$0xff]
                  %561 = vst [vmem:[%s503 + $0xe0] sm:$0xff] %v560
                  %v562 = vld [vmem:[%s502 + $0x1d0] sm:$0xff]
                  %563 = vst [vmem:[%s503 + $0xe8] sm:$0xff] %v562
                  %v564 = vld [vmem:[%s502 + $0x1e0] sm:$0xff]
                  %565 = vst [vmem:[%s503 + $0xf0] sm:$0xff] %v564
                  %v566 = vld [vmem:[%s502 + $0x1f0] sm:$0xff]
                  %567 = vst [vmem:[%s503 + $0xf8] sm:$0xff] %v566
                $region88: #{operation_net_forward.1} parent=82 // loop_footer
                  %s501 = sadd.s32 1, %s497
                $region89: #{operation_net_forward.1} parent=82 // loop_footer_branch
                  %496 = sbr.rel target = $region85
                $region90: #{operation_net_forward.1} parent=82 // loop_exit
                  _
              $region83: #{operation_net_forward.1} parent=67 // pred_fallthru
                _
              // Predicated region
              $region91: #{operation_net_forward.1} parent=67 // pred_check
                _
              $region92: #{operation_net_forward.1} parent=67 // pred_check_branch
                %569 = sbr.rel target = $region94
              $region93: #{operation_net_forward.1} parent=67 // pred_region
                _
              $region94: #{operation_net_forward.1} parent=67 // pred_fallthru
                _
            $region68: #{operation_net_forward.1} parent=63 // pred_fallthru
              _
            // Predicated region
            $region69: #{operation_net_forward.1} parent=63 // pred_check
              _
            $region70: #{operation_net_forward.1} parent=63 // pred_check_branch
              %419 = sbr.rel target = $region72
            $region71: #{operation_net_forward.1} parent=63 // pred_region
              %s421 = ssub.s32 256, 1
              loop: start=0, step=1, limit=1
              $region73: #{operation_net_forward.1} parent=71 // loop_pre_header
                _
              $region74: #{operation_net_forward.1} parent=71 // loop_header
                %s423 = sphi 0, %s427
                %p424 = scmp.ge.s32.totalorder %s423, 1
                %s428 = sphi %s413, %s413
                %s429 = sphi %s409, %s409
              $region75: #{operation_net_forward.1} parent=71 // loop_header_branch
                %426 = sbr.rel (%p424) target = $region79
              $region76: #{operation_net_forward.1} parent=71 // loop_body
                %v430 = vld [vmem:[%s428] sm:%s421]
                %431 = vst [vmem:[%s429] sm:%s421] %v430
                %v432 = vld [vmem:[%s428 + $0x10] sm:%s421]
                %433 = vst [vmem:[%s429 + $0x8] sm:%s421] %v432
                %v434 = vld [vmem:[%s428 + $0x20] sm:%s421]
                %435 = vst [vmem:[%s429 + $0x10] sm:%s421] %v434
                %v436 = vld [vmem:[%s428 + $0x30] sm:%s421]
                %437 = vst [vmem:[%s429 + $0x18] sm:%s421] %v436
                %v438 = vld [vmem:[%s428 + $0x40] sm:%s421]
                %439 = vst [vmem:[%s429 + $0x20] sm:%s421] %v438
                %v440 = vld [vmem:[%s428 + $0x50] sm:%s421]
                %441 = vst [vmem:[%s429 + $0x28] sm:%s421] %v440
                %v442 = vld [vmem:[%s428 + $0x60] sm:%s421]
                %443 = vst [vmem:[%s429 + $0x30] sm:%s421] %v442
                %v444 = vld [vmem:[%s428 + $0x70] sm:%s421]
                %445 = vst [vmem:[%s429 + $0x38] sm:%s421] %v444
                %v446 = vld [vmem:[%s428 + $0x80] sm:%s421]
                %447 = vst [vmem:[%s429 + $0x40] sm:%s421] %v446
                %v448 = vld [vmem:[%s428 + $0x90] sm:%s421]
                %449 = vst [vmem:[%s429 + $0x48] sm:%s421] %v448
                %v450 = vld [vmem:[%s428 + $0xa0] sm:%s421]
                %451 = vst [vmem:[%s429 + $0x50] sm:%s421] %v450
                %v452 = vld [vmem:[%s428 + $0xb0] sm:%s421]
                %453 = vst [vmem:[%s429 + $0x58] sm:%s421] %v452
                %v454 = vld [vmem:[%s428 + $0xc0] sm:%s421]
                %455 = vst [vmem:[%s429 + $0x60] sm:%s421] %v454
                %v456 = vld [vmem:[%s428 + $0xd0] sm:%s421]
                %457 = vst [vmem:[%s429 + $0x68] sm:%s421] %v456
                %v458 = vld [vmem:[%s428 + $0xe0] sm:%s421]
                %459 = vst [vmem:[%s429 + $0x70] sm:%s421] %v458
                %v460 = vld [vmem:[%s428 + $0xf0] sm:%s421]
                %461 = vst [vmem:[%s429 + $0x78] sm:%s421] %v460
                %v462 = vld [vmem:[%s428 + $0x100] sm:%s421]
                %463 = vst [vmem:[%s429 + $0x80] sm:%s421] %v462
                %v464 = vld [vmem:[%s428 + $0x110] sm:%s421]
                %465 = vst [vmem:[%s429 + $0x88] sm:%s421] %v464
                %v466 = vld [vmem:[%s428 + $0x120] sm:%s421]
                %467 = vst [vmem:[%s429 + $0x90] sm:%s421] %v466
                %v468 = vld [vmem:[%s428 + $0x130] sm:%s421]
                %469 = vst [vmem:[%s429 + $0x98] sm:%s421] %v468
                %v470 = vld [vmem:[%s428 + $0x140] sm:%s421]
                %471 = vst [vmem:[%s429 + $0xa0] sm:%s421] %v470
                %v472 = vld [vmem:[%s428 + $0x150] sm:%s421]
                %473 = vst [vmem:[%s429 + $0xa8] sm:%s421] %v472
                %v474 = vld [vmem:[%s428 + $0x160] sm:%s421]
                %475 = vst [vmem:[%s429 + $0xb0] sm:%s421] %v474
                %v476 = vld [vmem:[%s428 + $0x170] sm:%s421]
                %477 = vst [vmem:[%s429 + $0xb8] sm:%s421] %v476
                %v478 = vld [vmem:[%s428 + $0x180] sm:%s421]
                %479 = vst [vmem:[%s429 + $0xc0] sm:%s421] %v478
                %v480 = vld [vmem:[%s428 + $0x190] sm:%s421]
                %481 = vst [vmem:[%s429 + $0xc8] sm:%s421] %v480
                %v482 = vld [vmem:[%s428 + $0x1a0] sm:%s421]
                %483 = vst [vmem:[%s429 + $0xd0] sm:%s421] %v482
                %v484 = vld [vmem:[%s428 + $0x1b0] sm:%s421]
                %485 = vst [vmem:[%s429 + $0xd8] sm:%s421] %v484
                %v486 = vld [vmem:[%s428 + $0x1c0] sm:%s421]
                %487 = vst [vmem:[%s429 + $0xe0] sm:%s421] %v486
                %v488 = vld [vmem:[%s428 + $0x1d0] sm:%s421]
                %489 = vst [vmem:[%s429 + $0xe8] sm:%s421] %v488
                %v490 = vld [vmem:[%s428 + $0x1e0] sm:%s421]
                %491 = vst [vmem:[%s429 + $0xf0] sm:%s421] %v490
                %v492 = vld [vmem:[%s428 + $0x1f0] sm:%s421]
                %493 = vst [vmem:[%s429 + $0xf8] sm:%s421] %v492
              $region77: #{operation_net_forward.1} parent=71 // loop_footer
                %s427 = sadd.s32 1, %s423
              $region78: #{operation_net_forward.1} parent=71 // loop_footer_branch
                %422 = sbr.rel target = $region74
              $region79: #{operation_net_forward.1} parent=71 // loop_exit
                _
            $region72: #{operation_net_forward.1} parent=63 // pred_fallthru
              _
          $region64: #{operation_net_forward.1} parent=59 // pred_fallthru
            _
          %570 = vnop
        $region60: #{operation_net_forward.1} parent=55 // pred_fallthru
          _
      $region56: #{operation_net_forward.1} parent=5 // pred_fallthru
        _
      %p571 = scmp.le.s32.totalorder 1, %s20
      %p572 = scmp.lt.s32.totalorder %s20, 5
      %p573 = pnand %p571, %p572
      %p574 = pneg %p573
      // Predicated region
      $region95: #{operation_net_forward.1} parent=5 // pred_check
        _
      $region96: #{operation_net_forward.1} parent=5 // pred_check_branch
        %576 = sbr.rel (%p573) target = $region98
      $region97: #{operation_net_forward.1} parent=5 // pred_region
        %s577 = ssub.s32 %s20, 1
        %s578 = sand.u32 %s47, 1
        %s579 = sand.u32 %s47, 1
        %s580 = smul.addr %s579, 256
        %s581 = scalar_lea.vmem [#allocation2], %s580
        // Predicated region
        $region99: #{operation_net_forward.1} parent=97 // pred_check
          %p582 = pneg %p60
        $region100: #{operation_net_forward.1} parent=97 // pred_check_branch
          %584 = sbr.rel (%p582) target = $region102
        $region101: #{operation_net_forward.1} parent=97 // pred_region
          _
        $region102: #{operation_net_forward.1} parent=97 // pred_fallthru
          _
        %s585 = sand.u32 %s47, 1
        %s586 = sand.u32 %s47, 1
        %s587 = smul.addr %s586, 256
        %s588 = scalar_lea.vmem [#allocation2], %s587
        %p589 = pneg %p60
        %p590 = pneg %p57
        %p591 = pneg %p81
        %p592 = pneg %p78
        %p593 = pneg %p102
        %p594 = pneg %p99
        %p595 = pneg %p123
        %p596 = pneg %p120
        %p597 = pneg %p144
        %p598 = pneg %p141
        %p599 = pneg %p165
        %p600 = pneg %p162
        %p601 = pneg %p186
        %p602 = pneg %p183
        %p603 = pneg %p207
        %p604 = pneg %p204
        %p605 = pneg %p228
        %p606 = pneg %p225
        %p607 = pneg %p249
        %p608 = pneg %p246
        %p609 = pneg %p270
        %p610 = pneg %p267
        %p611 = pneg %p298
        %p612 = pneg %p295
        %s613 = sand.u32 %s285, 1
        %s614 = sand.u32 %s285, 1
        %s615 = smul.addr %s614, 16
        %s616 = scalar_lea.vmem [#allocation3], %s615
        %p617 = pneg %p326
        %p618 = pneg %p323
        %s619 = sand.u32 %s313, 1
        %s620 = sand.u32 %s313, 1
        %s621 = smul.addr %s620, 16
        %s622 = scalar_lea.vmem [#allocation4], %s621
        %p623 = pneg %p354
        %p624 = pneg %p351
        %s625 = sand.u32 %s341, 1
        %s626 = sand.u32 %s341, 1
        %s627 = smul.addr %s626, 16
        %s628 = scalar_lea.vmem [#allocation5], %s627
        %v630 = vld [vmem:[%s581] sm:$0xff]
        %v631 = vld [vmem:[%s581 + $0x8] sm:$0xff]
        %v632 = vld [vmem:[%s581 + $0x10] sm:$0xff]
        %v633 = vld [vmem:[%s581 + $0x18] sm:$0xff]
        %v634 = vld [vmem:[%s581 + $0x20] sm:$0xff]
        %v635 = vld [vmem:[%s581 + $0x28] sm:$0xff]
        %v636 = vld [vmem:[%s581 + $0x30] sm:$0xff]
        %v637 = vld [vmem:[%s581 + $0x38] sm:$0xff]
        %v638 = vld [vmem:[%s581 + $0x40] sm:$0xff]
        %v639 = vld [vmem:[%s581 + $0x48] sm:$0xff]
        %v640 = vld [vmem:[%s581 + $0x50] sm:$0xff]
        %v641 = vld [vmem:[%s581 + $0x58] sm:$0xff]
        %v642 = vld [vmem:[%s581 + $0x60] sm:$0xff]
        %v643 = vld [vmem:[%s581 + $0x68] sm:$0xff]
        %v644 = vld [vmem:[%s581 + $0x70] sm:$0xff]
        %v645 = vld [vmem:[%s581 + $0x78] sm:$0xff]
        %v646 = vld [vmem:[%s581 + $0x80] sm:$0xff]
        %v647 = vld [vmem:[%s581 + $0x88] sm:$0xff]
        %v648 = vld [vmem:[%s581 + $0x90] sm:$0xff]
        %v649 = vld [vmem:[%s581 + $0x98] sm:$0xff]
        %v650 = vld [vmem:[%s581 + $0xa0] sm:$0xff]
        %v651 = vld [vmem:[%s581 + $0xa8] sm:$0xff]
        %v652 = vld [vmem:[%s581 + $0xb0] sm:$0xff]
        %v653 = vld [vmem:[%s581 + $0xb8] sm:$0xff]
        %v654 = vld [vmem:[%s581 + $0xc0] sm:$0xff]
        %v655 = vld [vmem:[%s581 + $0xc8] sm:$0xff]
        %v656 = vld [vmem:[%s581 + $0xd0] sm:$0xff]
        %v657 = vld [vmem:[%s581 + $0xd8] sm:$0xff]
        %v658 = vld [vmem:[%s581 + $0xe0] sm:$0xff]
        %v659 = vld [vmem:[%s581 + $0xe8] sm:$0xff]
        %v660 = vld [vmem:[%s581 + $0xf0] sm:$0xff]
        %v661 = vld [vmem:[%s581 + $0xf8] sm:$0xff]
        %v662 = vpack.c.bf16 %v631, %v630
        %v663 = vpack.c.bf16 %v633, %v632
        %v664 = vpack.c.bf16 %v635, %v634
        %v665 = vpack.c.bf16 %v637, %v636
        %v666 = vpack.c.bf16 %v639, %v638
        %v667 = vpack.c.bf16 %v641, %v640
        %v668 = vpack.c.bf16 %v643, %v642
        %v669 = vpack.c.bf16 %v645, %v644
        %v670 = vpack.c.bf16 %v647, %v646
        %v671 = vpack.c.bf16 %v649, %v648
        %v672 = vpack.c.bf16 %v651, %v650
        %v673 = vpack.c.bf16 %v653, %v652
        %v674 = vpack.c.bf16 %v655, %v654
        %v675 = vpack.c.bf16 %v657, %v656
        %v676 = vpack.c.bf16 %v659, %v658
        %v677 = vpack.c.bf16 %v661, %v660
        %v678 = vld [vmem:[%s1] sm:$0xff]
        %v679 = vld [vmem:[%s1 + $0x8] sm:$0xff]
        %v680 = vld [vmem:[%s1 + $0x10] sm:$0xff]
        %v681 = vld [vmem:[%s1 + $0x18] sm:$0xff]
        %v682 = vld [vmem:[%s1 + $0x20] sm:$0xff]
        %v683 = vld [vmem:[%s1 + $0x28] sm:$0xff]
        %v684 = vld [vmem:[%s1 + $0x30] sm:$0xff]
        %v685 = vld [vmem:[%s1 + $0x38] sm:$0xff]
        %v686 = vld [vmem:[%s1 + $0x40] sm:$0xff]
        %v687 = vld [vmem:[%s1 + $0x48] sm:$0xff]
        %v688 = vld [vmem:[%s1 + $0x50] sm:$0xff]
        %v689 = vld [vmem:[%s1 + $0x58] sm:$0xff]
        %v690 = vld [vmem:[%s1 + $0x60] sm:$0xff]
        %v691 = vld [vmem:[%s1 + $0x68] sm:$0xff]
        %v692 = vld [vmem:[%s1 + $0x70] sm:$0xff]
        %v693 = vld [vmem:[%s1 + $0x78] sm:$0xff]
        %v694 = vld [vmem:[%s2] sm:$0xff]
        %v695 = vld [vmem:[%s2 + $0x8] sm:$0xff]
        %v696 = vld [vmem:[%s2 + $0x10] sm:$0xff]
        %v697 = vld [vmem:[%s2 + $0x18] sm:$0xff]
        %v698 = vld [vmem:[%s2 + $0x20] sm:$0xff]
        %v699 = vld [vmem:[%s2 + $0x28] sm:$0xff]
        %v700 = vld [vmem:[%s2 + $0x30] sm:$0xff]
        %v701 = vld [vmem:[%s2 + $0x38] sm:$0xff]
        %v702 = vld [vmem:[%s2 + $0x40] sm:$0xff]
        %v703 = vld [vmem:[%s2 + $0x48] sm:$0xff]
        %v704 = vld [vmem:[%s2 + $0x50] sm:$0xff]
        %v705 = vld [vmem:[%s2 + $0x58] sm:$0xff]
        %v706 = vld [vmem:[%s2 + $0x60] sm:$0xff]
        %v707 = vld [vmem:[%s2 + $0x68] sm:$0xff]
        %v708 = vld [vmem:[%s2 + $0x70] sm:$0xff]
        %v709 = vld [vmem:[%s2 + $0x78] sm:$0xff]
        %711 = vset.pattern.permute.xlu0 0
        %712 = vperm.xlu0 %711, %v694
        %v713 = vpop.permute.xlu0 %712
        %716 = vset.pattern.permute.xlu0 0
        %717 = vperm.xlu0 %716, %v695
        %v718 = vpop.permute.xlu0 %717
        %721 = vset.pattern.permute.xlu0 0
        %722 = vperm.xlu0 %721, %v696
        %v723 = vpop.permute.xlu0 %722
        %726 = vset.pattern.permute.xlu0 0
        %727 = vperm.xlu0 %726, %v697
        %v728 = vpop.permute.xlu0 %727
        %731 = vset.pattern.permute.xlu0 0
        %732 = vperm.xlu0 %731, %v698
        %v733 = vpop.permute.xlu0 %732
        %736 = vset.pattern.permute.xlu0 0
        %737 = vperm.xlu0 %736, %v699
        %v738 = vpop.permute.xlu0 %737
        %741 = vset.pattern.permute.xlu0 0
        %742 = vperm.xlu0 %741, %v700
        %v743 = vpop.permute.xlu0 %742
        %746 = vset.pattern.permute.xlu0 0
        %747 = vperm.xlu0 %746, %v701
        %v748 = vpop.permute.xlu0 %747
        %751 = vset.pattern.permute.xlu0 0
        %752 = vperm.xlu0 %751, %v702
        %v753 = vpop.permute.xlu0 %752
        %756 = vset.pattern.permute.xlu0 0
        %757 = vperm.xlu0 %756, %v703
        %v758 = vpop.permute.xlu0 %757
        %761 = vset.pattern.permute.xlu0 0
        %762 = vperm.xlu0 %761, %v704
        %v763 = vpop.permute.xlu0 %762
        %766 = vset.pattern.permute.xlu0 0
        %767 = vperm.xlu0 %766, %v705
        %v768 = vpop.permute.xlu0 %767
        %771 = vset.pattern.permute.xlu0 0
        %772 = vperm.xlu0 %771, %v706
        %v773 = vpop.permute.xlu0 %772
        %776 = vset.pattern.permute.xlu0 0
        %777 = vperm.xlu0 %776, %v707
        %v778 = vpop.permute.xlu0 %777
        %781 = vset.pattern.permute.xlu0 0
        %782 = vperm.xlu0 %781, %v708
        %v783 = vpop.permute.xlu0 %782
        %786 = vset.pattern.permute.xlu0 0
        %787 = vperm.xlu0 %786, %v709
        %v788 = vpop.permute.xlu0 %787
        %v806 = vunpack.c.l.b16 %v678
        %v807 = vunpack.c.h.b16 %v678
        %v808 = vunpack.c.l.b16 %v679
        %v809 = vunpack.c.h.b16 %v679
        %v810 = vunpack.c.l.b16 %v680
        %v811 = vunpack.c.h.b16 %v680
        %v812 = vunpack.c.l.b16 %v681
        %v813 = vunpack.c.h.b16 %v681
        %v814 = vunpack.c.l.b16 %v682
        %v815 = vunpack.c.h.b16 %v682
        %v816 = vunpack.c.l.b16 %v683
        %v817 = vunpack.c.h.b16 %v683
        %v818 = vunpack.c.l.b16 %v684
        %v819 = vunpack.c.h.b16 %v684
        %v820 = vunpack.c.l.b16 %v685
        %v821 = vunpack.c.h.b16 %v685
        %v822 = vunpack.c.l.b16 %v686
        %v823 = vunpack.c.h.b16 %v686
        %v824 = vunpack.c.l.b16 %v687
        %v825 = vunpack.c.h.b16 %v687
        %v826 = vunpack.c.l.b16 %v688
        %v827 = vunpack.c.h.b16 %v688
        %v828 = vunpack.c.l.b16 %v689
        %v829 = vunpack.c.h.b16 %v689
        %v830 = vunpack.c.l.b16 %v690
        %v831 = vunpack.c.h.b16 %v690
        %v832 = vunpack.c.l.b16 %v691
        %v833 = vunpack.c.h.b16 %v691
        %v834 = vunpack.c.l.b16 %v692
        %v835 = vunpack.c.h.b16 %v692
        %v836 = vunpack.c.l.b16 %v693
        %v837 = vunpack.c.h.b16 %v693
        %v838 = vpack.c.b16 %v808, %v806
        %v839 = vpack.c.b16 %v809, %v807
        %v840 = vpack.c.b16 %v812, %v810
        %v841 = vpack.c.b16 %v813, %v811
        %v842 = vpack.c.b16 %v816, %v814
        %v843 = vpack.c.b16 %v817, %v815
        %v844 = vpack.c.b16 %v820, %v818
        %v845 = vpack.c.b16 %v821, %v819
        %v846 = vpack.c.b16 %v824, %v822
        %v847 = vpack.c.b16 %v825, %v823
        %v848 = vpack.c.b16 %v828, %v826
        %v849 = vpack.c.b16 %v829, %v827
        %v850 = vpack.c.b16 %v832, %v830
        %v851 = vpack.c.b16 %v833, %v831
        %v852 = vpack.c.b16 %v836, %v834
        %v853 = vpack.c.b16 %v837, %v835
        %870 = vmatprep.subr.bf16.mxu0 0
        %871 = vmatpush1.bf16.msra.mxu0 %v669
        %872 = vmatprep.subr.bf16.mxu0 0
        %873 = vmatpush1.bf16.msra.mxu0 %v668
        %874 = vmatprep.subr.bf16.mxu0 0
        %875 = vmatpush1.bf16.msra.mxu0 %v667
        %876 = vmatprep.subr.bf16.mxu0 0
        %877 = vmatpush1.bf16.msra.mxu0 %v666
        %878 = vmatprep.subr.bf16.mxu0 0
        %879 = vmatpush1.bf16.msra.mxu0 %v665
        %880 = vmatprep.subr.bf16.mxu0 0
        %881 = vmatpush1.bf16.msra.mxu0 %v664
        %882 = vmatprep.subr.bf16.mxu0 0
        %883 = vmatpush1.bf16.msra.mxu0 %v663
        %884 = vmatprep.subr.bf16.mxu0 0
        %885 = vmatpush1.bf16.msra.mxu0 %v662
        %886 = vmatprep.subr.bf16.mxu0 0
        %887 = vmatpush2.bf16.msra.mxu0 %v677
        %888 = vmatprep.subr.bf16.mxu0 0
        %889 = vmatpush2.bf16.msra.mxu0 %v676
        %890 = vmatprep.subr.bf16.mxu0 0
        %891 = vmatpush2.bf16.msra.mxu0 %v675
        %892 = vmatprep.subr.bf16.mxu0 0
        %893 = vmatpush2.bf16.msra.mxu0 %v674
        %894 = vmatprep.subr.bf16.mxu0 0
        %895 = vmatpush2.bf16.msra.mxu0 %v673
        %896 = vmatprep.subr.bf16.mxu0 0
        %897 = vmatpush2.bf16.msra.mxu0 %v672
        %898 = vmatprep.subr.bf16.mxu0 0
        %899 = vmatpush2.bf16.msra.mxu0 %v671
        %900 = vmatprep.subr.bf16.mxu0 0
        %901 = vmatpush2.bf16.msra.mxu0 %v670
        %902 = vmatprep.mubr.bf16.mxu0 %v839
        %903 = vmatmul.mubr.bf16.gmra.mxu0 %v838
        %v904 = vpop.f32.mrf.mxu0
        %v905 = vadd.f32 %v713, %v904
        %v906 = vpop.f32.mrf.mxu0
        %v907 = vpop.f32.mrf.mxu0
        %v908 = vadd.f32 %v718, %v907
        %v909 = vpop.f32.mrf.mxu0
        %910 = vmatprep.mubr.bf16.mxu0 %v841
        %911 = vmatmul.mubr.bf16.gmra.mxu0 %v840
        %v912 = vpop.f32.mrf.mxu0
        %v913 = vadd.f32 %v723, %v912
        %v914 = vpop.f32.mrf.mxu0
        %v915 = vpop.f32.mrf.mxu0
        %v916 = vadd.f32 %v728, %v915
        %v917 = vpop.f32.mrf.mxu0
        %918 = vmatprep.mubr.bf16.mxu0 %v843
        %919 = vmatmul.mubr.bf16.gmra.mxu0 %v842
        %v920 = vpop.f32.mrf.mxu0
        %v921 = vadd.f32 %v733, %v920
        %v922 = vpop.f32.mrf.mxu0
        %v923 = vpop.f32.mrf.mxu0
        %v924 = vadd.f32 %v738, %v923
        %v925 = vpop.f32.mrf.mxu0
        %926 = vmatprep.mubr.bf16.mxu0 %v845
        %927 = vmatmul.mubr.bf16.gmra.mxu0 %v844
        %v928 = vpop.f32.mrf.mxu0
        %v929 = vadd.f32 %v743, %v928
        %v930 = vpop.f32.mrf.mxu0
        %v931 = vpop.f32.mrf.mxu0
        %v932 = vadd.f32 %v748, %v931
        %v933 = vpop.f32.mrf.mxu0
        %934 = vmatprep.mubr.bf16.mxu0 %v847
        %935 = vmatmul.mubr.bf16.gmra.mxu0 %v846
        %v936 = vpop.f32.mrf.mxu0
        %v937 = vadd.f32 %v753, %v936
        %v938 = vpop.f32.mrf.mxu0
        %v939 = vpop.f32.mrf.mxu0
        %v940 = vadd.f32 %v758, %v939
        %v941 = vpop.f32.mrf.mxu0
        %942 = vmatprep.mubr.bf16.mxu0 %v849
        %943 = vmatmul.mubr.bf16.gmra.mxu0 %v848
        %v944 = vpop.f32.mrf.mxu0
        %v945 = vadd.f32 %v763, %v944
        %v946 = vpop.f32.mrf.mxu0
        %v947 = vpop.f32.mrf.mxu0
        %v948 = vadd.f32 %v768, %v947
        %v949 = vpop.f32.mrf.mxu0
        %950 = vmatprep.mubr.bf16.mxu0 %v851
        %951 = vmatmul.mubr.bf16.gmra.mxu0 %v850
        %v952 = vpop.f32.mrf.mxu0
        %v953 = vadd.f32 %v773, %v952
        %v954 = vpop.f32.mrf.mxu0
        %v955 = vpop.f32.mrf.mxu0
        %v956 = vadd.f32 %v778, %v955
        %v957 = vpop.f32.mrf.mxu0
        %958 = vmatprep.mubr.bf16.mxu0 %v853
        %959 = vmatmul.mubr.bf16.gmra.mxu0 %v852
        %v960 = vpop.f32.mrf.mxu0
        %v961 = vadd.f32 %v783, %v960
        %v962 = vpop.f32.mrf.mxu0
        %v963 = vpop.f32.mrf.mxu0
        %v964 = vadd.f32 %v788, %v963
        %v965 = vpop.f32.mrf.mxu0
        %966 = vdwg.mxu0
        %v967 = vmax.f32 %v905, 0.0
        %v968 = vmax.f32 %v908, 0.0
        %v969 = vmax.f32 %v913, 0.0
        %v970 = vmax.f32 %v916, 0.0
        %v971 = vmax.f32 %v921, 0.0
        %v972 = vmax.f32 %v924, 0.0
        %v973 = vmax.f32 %v929, 0.0
        %v974 = vmax.f32 %v932, 0.0
        %v975 = vmax.f32 %v937, 0.0
        %v976 = vmax.f32 %v940, 0.0
        %v977 = vmax.f32 %v945, 0.0
        %v978 = vmax.f32 %v948, 0.0
        %v979 = vmax.f32 %v953, 0.0
        %v980 = vmax.f32 %v956, 0.0
        %v981 = vmax.f32 %v961, 0.0
        %v982 = vmax.f32 %v964, 0.0
        %v983 = vpack.c.bf16 %v968, %v967
        %v984 = vpack.c.bf16 %v970, %v969
        %v985 = vpack.c.bf16 %v972, %v971
        %v986 = vpack.c.bf16 %v974, %v973
        %v987 = vpack.c.bf16 %v976, %v975
        %v988 = vpack.c.bf16 %v978, %v977
        %v989 = vpack.c.bf16 %v980, %v979
        %v990 = vpack.c.bf16 %v982, %v981
        %v991 = vld [vmem:[%s3] sm:$0xf]
        %v992 = vld [vmem:[%s3 + $0x4] sm:$0xf]
        %v993 = vld [vmem:[%s3 + $0x8] sm:$0xf]
        %v994 = vld [vmem:[%s3 + $0xc] sm:$0xf]
        %v995 = vld [vmem:[%s3 + $0x10] sm:$0xf]
        %v996 = vld [vmem:[%s3 + $0x14] sm:$0xf]
        %v997 = vld [vmem:[%s3 + $0x18] sm:$0xf]
        %v998 = vld [vmem:[%s3 + $0x1c] sm:$0xf]
        %v999 = vld [vmem:[%s3 + $0x20] sm:$0xf]
        %v1000 = vld [vmem:[%s3 + $0x24] sm:$0xf]
        %v1001 = vld [vmem:[%s3 + $0x28] sm:$0xf]
        %v1002 = vld [vmem:[%s3 + $0x2c] sm:$0xf]
        %v1003 = vld [vmem:[%s3 + $0x30] sm:$0xf]
        %v1004 = vld [vmem:[%s3 + $0x34] sm:$0xf]
        %v1005 = vld [vmem:[%s3 + $0x38] sm:$0xf]
        %v1006 = vld [vmem:[%s3 + $0x3c] sm:$0xf]
        %v1007 = vld [vmem:[%s4] sm:$0xff]
        %v1008 = vld [vmem:[%s4 + $0x8] sm:$0xff]
        %v1009 = vld [vmem:[%s4 + $0x10] sm:$0xff]
        %v1010 = vld [vmem:[%s4 + $0x18] sm:$0xff]
        %v1011 = vld [vmem:[%s4 + $0x20] sm:$0xff]
        %v1012 = vld [vmem:[%s4 + $0x28] sm:$0xff]
        %v1013 = vld [vmem:[%s4 + $0x30] sm:$0xff]
        %v1014 = vld [vmem:[%s4 + $0x38] sm:$0xff]
        %v1015 = vld [vmem:[%s4 + $0x40] sm:$0xff]
        %v1016 = vld [vmem:[%s4 + $0x48] sm:$0xff]
        %v1017 = vld [vmem:[%s4 + $0x50] sm:$0xff]
        %v1018 = vld [vmem:[%s4 + $0x58] sm:$0xff]
        %v1019 = vld [vmem:[%s4 + $0x60] sm:$0xff]
        %v1020 = vld [vmem:[%s4 + $0x68] sm:$0xff]
        %v1021 = vld [vmem:[%s4 + $0x70] sm:$0xff]
        %v1022 = vld [vmem:[%s4 + $0x78] sm:$0xff]
        %1024 = vset.pattern.permute.xlu0 0
        %1025 = vperm.xlu0 %1024, %v1007
        %v1026 = vpop.permute.xlu0 %1025
        %1029 = vset.pattern.permute.xlu0 0
        %1030 = vperm.xlu0 %1029, %v1008
        %v1031 = vpop.permute.xlu0 %1030
        %1034 = vset.pattern.permute.xlu0 0
        %1035 = vperm.xlu0 %1034, %v1009
        %v1036 = vpop.permute.xlu0 %1035
        %1039 = vset.pattern.permute.xlu0 0
        %1040 = vperm.xlu0 %1039, %v1010
        %v1041 = vpop.permute.xlu0 %1040
        %1044 = vset.pattern.permute.xlu0 0
        %1045 = vperm.xlu0 %1044, %v1011
        %v1046 = vpop.permute.xlu0 %1045
        %1049 = vset.pattern.permute.xlu0 0
        %1050 = vperm.xlu0 %1049, %v1012
        %v1051 = vpop.permute.xlu0 %1050
        %1054 = vset.pattern.permute.xlu0 0
        %1055 = vperm.xlu0 %1054, %v1013
        %v1056 = vpop.permute.xlu0 %1055
        %1059 = vset.pattern.permute.xlu0 0
        %1060 = vperm.xlu0 %1059, %v1014
        %v1061 = vpop.permute.xlu0 %1060
        %1064 = vset.pattern.permute.xlu0 0
        %1065 = vperm.xlu0 %1064, %v1015
        %v1066 = vpop.permute.xlu0 %1065
        %1069 = vset.pattern.permute.xlu0 0
        %1070 = vperm.xlu0 %1069, %v1016
        %v1071 = vpop.permute.xlu0 %1070
        %1074 = vset.pattern.permute.xlu0 0
        %1075 = vperm.xlu0 %1074, %v1017
        %v1076 = vpop.permute.xlu0 %1075
        %1079 = vset.pattern.permute.xlu0 0
        %1080 = vperm.xlu0 %1079, %v1018
        %v1081 = vpop.permute.xlu0 %1080
        %1084 = vset.pattern.permute.xlu0 0
        %1085 = vperm.xlu0 %1084, %v1019
        %v1086 = vpop.permute.xlu0 %1085
        %1089 = vset.pattern.permute.xlu0 0
        %1090 = vperm.xlu0 %1089, %v1020
        %v1091 = vpop.permute.xlu0 %1090
        %1094 = vset.pattern.permute.xlu0 0
        %1095 = vperm.xlu0 %1094, %v1021
        %v1096 = vpop.permute.xlu0 %1095
        %1099 = vset.pattern.permute.xlu0 0
        %1100 = vperm.xlu0 %1099, %v1022
        %v1101 = vpop.permute.xlu0 %1100
        %v1119 = vunpack.c.l.b16 %v991
        %v1120 = vunpack.c.l.b16 %v992
        %v1121 = vunpack.c.l.b16 %v993
        %v1122 = vunpack.c.l.b16 %v994
        %v1123 = vunpack.c.l.b16 %v995
        %v1124 = vunpack.c.l.b16 %v996
        %v1125 = vunpack.c.l.b16 %v997
        %v1126 = vunpack.c.l.b16 %v998
        %v1127 = vunpack.c.l.b16 %v999
        %v1128 = vunpack.c.l.b16 %v1000
        %v1129 = vunpack.c.l.b16 %v1001
        %v1130 = vunpack.c.l.b16 %v1002
        %v1131 = vunpack.c.l.b16 %v1003
        %v1132 = vunpack.c.l.b16 %v1004
        %v1133 = vunpack.c.l.b16 %v1005
        %v1134 = vunpack.c.l.b16 %v1006
        %v1135 = vpack.c.b16 %v1120, %v1119
        %v1136 = vpack.c.b16 %v1122, %v1121
        %v1137 = vpack.c.b16 %v1124, %v1123
        %v1138 = vpack.c.b16 %v1126, %v1125
        %v1139 = vpack.c.b16 %v1128, %v1127
        %v1140 = vpack.c.b16 %v1130, %v1129
        %v1141 = vpack.c.b16 %v1132, %v1131
        %v1142 = vpack.c.b16 %v1134, %v1133
        %1151 = vmatprep.subr.bf16.mxu0 0
        %1152 = vmatpush1.bf16.msra.mxu0 %v990
        %1153 = vmatprep.subr.bf16.mxu0 0
        %1154 = vmatpush1.bf16.msra.mxu0 %v989
        %1155 = vmatprep.subr.bf16.mxu0 0
        %1156 = vmatpush1.bf16.msra.mxu0 %v988
        %1157 = vmatprep.subr.bf16.mxu0 0
        %1158 = vmatpush1.bf16.msra.mxu0 %v987
        %1159 = vmatprep.subr.bf16.mxu0 0
        %1160 = vmatpush1.bf16.msra.mxu0 %v986
        %1161 = vmatprep.subr.bf16.mxu0 0
        %1162 = vmatpush1.bf16.msra.mxu0 %v985
        %1163 = vmatprep.subr.bf16.mxu0 0
        %1164 = vmatpush1.bf16.msra.mxu0 %v984
        %1165 = vmatprep.subr.bf16.mxu0 0
        %1166 = vmatpush1.bf16.msra.mxu0 %v983
        %1167 = vmatprep.subr.bf16.mxu0 0
        %1168 = vmatpush2.bf16.msra.mxu0 0
        %1169 = vmatprep.subr.bf16.mxu0 0
        %1170 = vmatpush2.bf16.msra.mxu0 0
        %1171 = vmatprep.subr.bf16.mxu0 0
        %1172 = vmatpush2.bf16.msra.mxu0 0
        %1173 = vmatprep.subr.bf16.mxu0 0
        %1174 = vmatpush2.bf16.msra.mxu0 0
        %1175 = vmatprep.subr.bf16.mxu0 0
        %1176 = vmatpush2.bf16.msra.mxu0 0
        %1177 = vmatprep.subr.bf16.mxu0 0
        %1178 = vmatpush2.bf16.msra.mxu0 0
        %1179 = vmatprep.subr.bf16.mxu0 0
        %1180 = vmatpush2.bf16.msra.mxu0 0
        %1181 = vmatprep.subr.bf16.mxu0 0
        %1182 = vmatpush2.bf16.msra.mxu0 0
        %1183 = vmatprep.mubr.bf16.mxu0 0
        %1184 = vmatmul.mubr.bf16.gmra.mxu0 %v1135
        %v1185 = vpop.f32.mrf.mxu0
        %v1186 = vadd.f32 %v1026, %v1185
        %v1187 = vpop.f32.mrf.mxu0
        %v1188 = vpop.f32.mrf.mxu0
        %v1189 = vadd.f32 %v1031, %v1188
        %v1190 = vpop.f32.mrf.mxu0
        %1191 = vmatprep.mubr.bf16.mxu0 0
        %1192 = vmatmul.mubr.bf16.gmra.mxu0 %v1136
        %v1193 = vpop.f32.mrf.mxu0
        %v1194 = vadd.f32 %v1036, %v1193
        %v1195 = vpop.f32.mrf.mxu0
        %v1196 = vpop.f32.mrf.mxu0
        %v1197 = vadd.f32 %v1041, %v1196
        %v1198 = vpop.f32.mrf.mxu0
        %1199 = vmatprep.mubr.bf16.mxu0 0
        %1200 = vmatmul.mubr.bf16.gmra.mxu0 %v1137
        %v1201 = vpop.f32.mrf.mxu0
        %v1202 = vadd.f32 %v1046, %v1201
        %v1203 = vpop.f32.mrf.mxu0
        %v1204 = vpop.f32.mrf.mxu0
        %v1205 = vadd.f32 %v1051, %v1204
        %v1206 = vpop.f32.mrf.mxu0
        %1207 = vmatprep.mubr.bf16.mxu0 0
        %1208 = vmatmul.mubr.bf16.gmra.mxu0 %v1138
        %v1209 = vpop.f32.mrf.mxu0
        %v1210 = vadd.f32 %v1056, %v1209
        %v1211 = vpop.f32.mrf.mxu0
        %v1212 = vpop.f32.mrf.mxu0
        %v1213 = vadd.f32 %v1061, %v1212
        %v1214 = vpop.f32.mrf.mxu0
        %1215 = vmatprep.mubr.bf16.mxu0 0
        %1216 = vmatmul.mubr.bf16.gmra.mxu0 %v1139
        %v1217 = vpop.f32.mrf.mxu0
        %v1218 = vadd.f32 %v1066, %v1217
        %v1219 = vpop.f32.mrf.mxu0
        %v1220 = vpop.f32.mrf.mxu0
        %v1221 = vadd.f32 %v1071, %v1220
        %v1222 = vpop.f32.mrf.mxu0
        %1223 = vmatprep.mubr.bf16.mxu0 0
        %1224 = vmatmul.mubr.bf16.gmra.mxu0 %v1140
        %v1225 = vpop.f32.mrf.mxu0
        %v1226 = vadd.f32 %v1076, %v1225
        %v1227 = vpop.f32.mrf.mxu0
        %v1228 = vpop.f32.mrf.mxu0
        %v1229 = vadd.f32 %v1081, %v1228
        %v1230 = vpop.f32.mrf.mxu0
        %1231 = vmatprep.mubr.bf16.mxu0 0
        %1232 = vmatmul.mubr.bf16.gmra.mxu0 %v1141
        %v1233 = vpop.f32.mrf.mxu0
        %v1234 = vadd.f32 %v1086, %v1233
        %v1235 = vpop.f32.mrf.mxu0
        %v1236 = vpop.f32.mrf.mxu0
        %v1237 = vadd.f32 %v1091, %v1236
        %v1238 = vpop.f32.mrf.mxu0
        %1239 = vmatprep.mubr.bf16.mxu0 0
        %1240 = vmatmul.mubr.bf16.gmra.mxu0 %v1142
        %v1241 = vpop.f32.mrf.mxu0
        %v1242 = vadd.f32 %v1096, %v1241
        %v1243 = vpop.f32.mrf.mxu0
        %v1244 = vpop.f32.mrf.mxu0
        %v1245 = vadd.f32 %v1101, %v1244
        %v1246 = vpop.f32.mrf.mxu0
        %1247 = vdwg.mxu0
        %v1248 = vmax.f32 %v1186, 0.0
        %v1249 = vmax.f32 %v1189, 0.0
        %v1250 = vmax.f32 %v1194, 0.0
        %v1251 = vmax.f32 %v1197, 0.0
        %v1252 = vmax.f32 %v1202, 0.0
        %v1253 = vmax.f32 %v1205, 0.0
        %v1254 = vmax.f32 %v1210, 0.0
        %v1255 = vmax.f32 %v1213, 0.0
        %v1256 = vmax.f32 %v1218, 0.0
        %v1257 = vmax.f32 %v1221, 0.0
        %v1258 = vmax.f32 %v1226, 0.0
        %v1259 = vmax.f32 %v1229, 0.0
        %v1260 = vmax.f32 %v1234, 0.0
        %v1261 = vmax.f32 %v1237, 0.0
        %v1262 = vmax.f32 %v1242, 0.0
        %v1263 = vmax.f32 %v1245, 0.0
        %v1264 = vpack.c.bf16 %v1249, %v1248
        %v1265 = vpack.c.bf16 %v1251, %v1250
        %v1266 = vpack.c.bf16 %v1253, %v1252
        %v1267 = vpack.c.bf16 %v1255, %v1254
        %v1268 = vpack.c.bf16 %v1257, %v1256
        %v1269 = vpack.c.bf16 %v1259, %v1258
        %v1270 = vpack.c.bf16 %v1261, %v1260
        %v1271 = vpack.c.bf16 %v1263, %v1262
        %v1272 = vld [vmem:[%s5] sm:$0xf]
        %v1273 = vld [vmem:[%s5 + $0x4] sm:$0x3]
        %v1274 = vld [vmem:[%s6] sm:$0xff]
        %v1275 = vld [vmem:[%s6 + $0x8] sm:$0xf]
        %1277 = vset.pattern.permute.xlu0 0
        %1278 = vperm.xlu0 %1277, %v1274
        %v1279 = vpop.permute.xlu0 %1278
        %1282 = vset.pattern.permute.xlu0 0
        %1283 = vperm.xlu0 %1282, %v1275
        %v1284 = vpop.permute.xlu0 %1283
        %v1288 = vunpack.c.l.b16 %v1272
        %v1289 = vunpack.c.l.b16 %v1273
        %v1290 = vpack.c.b16 %v1289, %v1288
        %1292 = vmatprep.subr.bf16.mxu0 0
        %1293 = vmatpush1.bf16.msra.mxu0 %v1271
        %1294 = vmatprep.subr.bf16.mxu0 0
        %1295 = vmatpush1.bf16.msra.mxu0 %v1270
        %1296 = vmatprep.subr.bf16.mxu0 0
        %1297 = vmatpush1.bf16.msra.mxu0 %v1269
        %1298 = vmatprep.subr.bf16.mxu0 0
        %1299 = vmatpush1.bf16.msra.mxu0 %v1268
        %1300 = vmatprep.subr.bf16.mxu0 0
        %1301 = vmatpush1.bf16.msra.mxu0 %v1267
        %1302 = vmatprep.subr.bf16.mxu0 0
        %1303 = vmatpush1.bf16.msra.mxu0 %v1266
        %1304 = vmatprep.subr.bf16.mxu0 0
        %1305 = vmatpush1.bf16.msra.mxu0 %v1265
        %1306 = vmatprep.subr.bf16.mxu0 0
        %1307 = vmatpush1.bf16.msra.mxu0 %v1264
        %1308 = vmatprep.subr.bf16.mxu0 0
        %1309 = vmatpush2.bf16.msra.mxu0 0
        %1310 = vmatprep.subr.bf16.mxu0 0
        %1311 = vmatpush2.bf16.msra.mxu0 0
        %1312 = vmatprep.subr.bf16.mxu0 0
        %1313 = vmatpush2.bf16.msra.mxu0 0
        %1314 = vmatprep.subr.bf16.mxu0 0
        %1315 = vmatpush2.bf16.msra.mxu0 0
        %1316 = vmatprep.subr.bf16.mxu0 0
        %1317 = vmatpush2.bf16.msra.mxu0 0
        %1318 = vmatprep.subr.bf16.mxu0 0
        %1319 = vmatpush2.bf16.msra.mxu0 0
        %1320 = vmatprep.subr.bf16.mxu0 0
        %1321 = vmatpush2.bf16.msra.mxu0 0
        %1322 = vmatprep.subr.bf16.mxu0 0
        %1323 = vmatpush2.bf16.msra.mxu0 0
        %1324 = vmatprep.mubr.bf16.mxu0 0
        %1325 = vmatmul.mubr.bf16.gmra.mxu0 %v1290
        %v1326 = vpop.f32.mrf.mxu0
        %v1327 = vadd.f32 %v1279, %v1326
        %v1328 = vpop.f32.mrf.mxu0
        %v1329 = vpop.f32.mrf.mxu0
        %v1330 = vadd.f32 %v1284, %v1329
        %v1331 = vpop.f32.mrf.mxu0
        %1332 = vdwg.mxu0
        %1333 = vst [vmem:[%s616] sm:$0xff] %v1327
        %1334 = vst [vmem:[%s616 + $0x8] sm:$0xf] %v1330
        %v1335 = vld [vmem:[%s7] sm:$0xf]
        %v1336 = vld [vmem:[%s7 + $0x4] sm:$0x3]
        %v1337 = vld [vmem:[%s8] sm:$0xff]
        %v1338 = vld [vmem:[%s8 + $0x8] sm:$0xf]
        %1340 = vset.pattern.permute.xlu0 0
        %1341 = vperm.xlu0 %1340, %v1337
        %v1342 = vpop.permute.xlu0 %1341
        %1345 = vset.pattern.permute.xlu0 0
        %1346 = vperm.xlu0 %1345, %v1338
        %v1347 = vpop.permute.xlu0 %1346
        %v1351 = vunpack.c.l.b16 %v1335
        %v1352 = vunpack.c.l.b16 %v1336
        %v1353 = vpack.c.b16 %v1352, %v1351
        %1355 = vmatprep.subr.bf16.mxu0 0
        %1356 = vmatpush1.bf16.msra.mxu0 %v1271
        %1357 = vmatprep.subr.bf16.mxu0 0
        %1358 = vmatpush1.bf16.msra.mxu0 %v1270
        %1359 = vmatprep.subr.bf16.mxu0 0
        %1360 = vmatpush1.bf16.msra.mxu0 %v1269
        %1361 = vmatprep.subr.bf16.mxu0 0
        %1362 = vmatpush1.bf16.msra.mxu0 %v1268
        %1363 = vmatprep.subr.bf16.mxu0 0
        %1364 = vmatpush1.bf16.msra.mxu0 %v1267
        %1365 = vmatprep.subr.bf16.mxu0 0
        %1366 = vmatpush1.bf16.msra.mxu0 %v1266
        %1367 = vmatprep.subr.bf16.mxu0 0
        %1368 = vmatpush1.bf16.msra.mxu0 %v1265
        %1369 = vmatprep.subr.bf16.mxu0 0
        %1370 = vmatpush1.bf16.msra.mxu0 %v1264
        %1371 = vmatprep.subr.bf16.mxu0 0
        %1372 = vmatpush2.bf16.msra.mxu0 0
        %1373 = vmatprep.subr.bf16.mxu0 0
        %1374 = vmatpush2.bf16.msra.mxu0 0
        %1375 = vmatprep.subr.bf16.mxu0 0
        %1376 = vmatpush2.bf16.msra.mxu0 0
        %1377 = vmatprep.subr.bf16.mxu0 0
        %1378 = vmatpush2.bf16.msra.mxu0 0
        %1379 = vmatprep.subr.bf16.mxu0 0
        %1380 = vmatpush2.bf16.msra.mxu0 0
        %1381 = vmatprep.subr.bf16.mxu0 0
        %1382 = vmatpush2.bf16.msra.mxu0 0
        %1383 = vmatprep.subr.bf16.mxu0 0
        %1384 = vmatpush2.bf16.msra.mxu0 0
        %1385 = vmatprep.subr.bf16.mxu0 0
        %1386 = vmatpush2.bf16.msra.mxu0 0
        %1387 = vmatprep.mubr.bf16.mxu0 0
        %1388 = vmatmul.mubr.bf16.gmra.mxu0 %v1353
        %v1389 = vpop.f32.mrf.mxu0
        %v1390 = vadd.f32 %v1342, %v1389
        %v1391 = vpop.f32.mrf.mxu0
        %v1392 = vpop.f32.mrf.mxu0
        %v1393 = vadd.f32 %v1347, %v1392
        %v1394 = vpop.f32.mrf.mxu0
        %1395 = vdwg.mxu0
        %1396 = vst [vmem:[%s622] sm:$0xff] %v1390
        %1397 = vst [vmem:[%s622 + $0x8] sm:$0xf] %v1393
        %v1398 = vld [vmem:[%s9] sm:$0xf]
        %v1399 = vld [vmem:[%s9 + $0x4] sm:$0x3]
        %v1400 = vld [vmem:[%s10] sm:$0xff]
        %v1401 = vld [vmem:[%s10 + $0x8] sm:$0xf]
        %1403 = vset.pattern.permute.xlu0 0
        %1404 = vperm.xlu0 %1403, %v1400
        %v1405 = vpop.permute.xlu0 %1404
        %1408 = vset.pattern.permute.xlu0 0
        %1409 = vperm.xlu0 %1408, %v1401
        %v1410 = vpop.permute.xlu0 %1409
        %v1414 = vunpack.c.l.b16 %v1398
        %v1415 = vunpack.c.l.b16 %v1399
        %v1416 = vpack.c.b16 %v1415, %v1414
        %1418 = vmatprep.subr.bf16.mxu0 0
        %1419 = vmatpush1.bf16.msra.mxu0 %v1271
        %1420 = vmatprep.subr.bf16.mxu0 0
        %1421 = vmatpush1.bf16.msra.mxu0 %v1270
        %1422 = vmatprep.subr.bf16.mxu0 0
        %1423 = vmatpush1.bf16.msra.mxu0 %v1269
        %1424 = vmatprep.subr.bf16.mxu0 0
        %1425 = vmatpush1.bf16.msra.mxu0 %v1268
        %1426 = vmatprep.subr.bf16.mxu0 0
        %1427 = vmatpush1.bf16.msra.mxu0 %v1267
        %1428 = vmatprep.subr.bf16.mxu0 0
        %1429 = vmatpush1.bf16.msra.mxu0 %v1266
        %1430 = vmatprep.subr.bf16.mxu0 0
        %1431 = vmatpush1.bf16.msra.mxu0 %v1265
        %1432 = vmatprep.subr.bf16.mxu0 0
        %1433 = vmatpush1.bf16.msra.mxu0 %v1264
        %1434 = vmatprep.subr.bf16.mxu0 0
        %1435 = vmatpush2.bf16.msra.mxu0 0
        %1436 = vmatprep.subr.bf16.mxu0 0
        %1437 = vmatpush2.bf16.msra.mxu0 0
        %1438 = vmatprep.subr.bf16.mxu0 0
        %1439 = vmatpush2.bf16.msra.mxu0 0
        %1440 = vmatprep.subr.bf16.mxu0 0
        %1441 = vmatpush2.bf16.msra.mxu0 0
        %1442 = vmatprep.subr.bf16.mxu0 0
        %1443 = vmatpush2.bf16.msra.mxu0 0
        %1444 = vmatprep.subr.bf16.mxu0 0
        %1445 = vmatpush2.bf16.msra.mxu0 0
        %1446 = vmatprep.subr.bf16.mxu0 0
        %1447 = vmatpush2.bf16.msra.mxu0 0
        %1448 = vmatprep.subr.bf16.mxu0 0
        %1449 = vmatpush2.bf16.msra.mxu0 0
        %1450 = vmatprep.mubr.bf16.mxu0 0
        %1451 = vmatmul.mubr.bf16.gmra.mxu0 %v1416
        %v1452 = vpop.f32.mrf.mxu0
        %v1453 = vadd.f32 %v1405, %v1452
        %v1454 = vpop.f32.mrf.mxu0
        %v1455 = vpop.f32.mrf.mxu0
        %v1456 = vadd.f32 %v1410, %v1455
        %v1457 = vpop.f32.mrf.mxu0
        %1458 = vdwg.mxu0
        %1459 = vst [vmem:[%s628] sm:$0xff] %v1453
        %1460 = vst [vmem:[%s628 + $0x8] sm:$0xf] %v1456
        %s1461 = sand.u32 %s285, 1
        %s1462 = sand.u32 %s285, 1
        %s1463 = smul.addr %s1462, 16
        %s1464 = scalar_lea.vmem [#allocation3], %s1463
        %s1465 = sand.u32 %s313, 1
        %s1466 = sand.u32 %s313, 1
        %s1467 = smul.addr %s1466, 16
        %s1468 = scalar_lea.vmem [#allocation4], %s1467
        %s1469 = sand.u32 %s341, 1
        %s1470 = sand.u32 %s341, 1
        %s1471 = smul.addr %s1470, 16
        %s1472 = scalar_lea.vmem [#allocation5], %s1471
        // Predicated region
        $region103: #{operation_net_forward.1} parent=97 // pred_check
          %p1473 = pneg %p295
        $region104: #{operation_net_forward.1} parent=97 // pred_check_branch
          %1475 = sbr.rel (%p1473) target = $region106
        $region105: #{operation_net_forward.1} parent=97 // pred_region
          %s1476 = smul.addr %s29, 4
          %s1477 = sadd.s32 %s30, %s1476
          %s1478 = smul.addr %s1477, 8
          %s1479 = scalar_lea.vmem %s11, %s1478
          // Predicated region
          $region107: #{operation_net_forward.1} parent=105 // pred_check
            _
          $region108: #{operation_net_forward.1} parent=105 // pred_check_branch
            %1481 = sbr.rel (0) target = $region110
          $region109: #{operation_net_forward.1} parent=105 // pred_region
            // Predicated region
            $region111: #{operation_net_forward.1} parent=109 // pred_check
              _
            $region112: #{operation_net_forward.1} parent=109 // pred_check_branch
              %1483 = sbr.rel (0) target = $region114
            $region113: #{operation_net_forward.1} parent=109 // pred_region
              // Predicated region
              $region126: #{operation_net_forward.1} parent=113 // pred_check
                _
              $region127: #{operation_net_forward.1} parent=113 // pred_check_branch
                %1501 = sbr.rel (0) target = $region129
              $region128: #{operation_net_forward.1} parent=113 // pred_region
                loop: start=0, step=1, limit=1
                $region130: #{operation_net_forward.1} parent=128 // loop_pre_header
                  _
                $region131: #{operation_net_forward.1} parent=128 // loop_header
                  %s1503 = sphi 0, %s1507
                  %p1504 = scmp.ge.s32.totalorder %s1503, 1
                  %s1508 = sphi %s1464, %s1464
                  %s1509 = sphi %s1479, %s1479
                $region132: #{operation_net_forward.1} parent=128 // loop_header_branch
                  %1506 = sbr.rel (%p1504) target = $region136
                $region133: #{operation_net_forward.1} parent=128 // loop_body
                  %v1510 = vld [vmem:[%s1508] sm:$0xff]
                  %1511 = vst [vmem:[%s1509] sm:$0xff] %v1510
                  %v1512 = vld [vmem:[%s1508 + $0x8] sm:$0xff]
                  %1513 = vst [vmem:[%s1509 + $0x10] sm:$0xff] %v1512
                $region134: #{operation_net_forward.1} parent=128 // loop_footer
                  %s1507 = sadd.s32 1, %s1503
                $region135: #{operation_net_forward.1} parent=128 // loop_footer_branch
                  %1502 = sbr.rel target = $region131
                $region136: #{operation_net_forward.1} parent=128 // loop_exit
                  _
              $region129: #{operation_net_forward.1} parent=113 // pred_fallthru
                _
              // Predicated region
              $region137: #{operation_net_forward.1} parent=113 // pred_check
                _
              $region138: #{operation_net_forward.1} parent=113 // pred_check_branch
                %1515 = sbr.rel target = $region140
              $region139: #{operation_net_forward.1} parent=113 // pred_region
                _
              $region140: #{operation_net_forward.1} parent=113 // pred_fallthru
                _
            $region114: #{operation_net_forward.1} parent=109 // pred_fallthru
              _
            // Predicated region
            $region115: #{operation_net_forward.1} parent=109 // pred_check
              _
            $region116: #{operation_net_forward.1} parent=109 // pred_check_branch
              %1485 = sbr.rel target = $region118
            $region117: #{operation_net_forward.1} parent=109 // pred_region
              %s1487 = ssub.s32 256, 1
              loop: start=0, step=1, limit=1
              $region119: #{operation_net_forward.1} parent=117 // loop_pre_header
                _
              $region120: #{operation_net_forward.1} parent=117 // loop_header
                %s1489 = sphi 0, %s1493
                %p1490 = scmp.ge.s32.totalorder %s1489, 1
                %s1494 = sphi %s1464, %s1464
                %s1495 = sphi %s1479, %s1479
              $region121: #{operation_net_forward.1} parent=117 // loop_header_branch
                %1492 = sbr.rel (%p1490) target = $region125
              $region122: #{operation_net_forward.1} parent=117 // loop_body
                %v1496 = vld [vmem:[%s1494] sm:%s1487]
                %1497 = vst [vmem:[%s1495] sm:%s1487] %v1496
                %v1498 = vld [vmem:[%s1494 + $0x8] sm:%s1487]
                %1499 = vst [vmem:[%s1495 + $0x10] sm:%s1487] %v1498
              $region123: #{operation_net_forward.1} parent=117 // loop_footer
                %s1493 = sadd.s32 1, %s1489
              $region124: #{operation_net_forward.1} parent=117 // loop_footer_branch
                %1488 = sbr.rel target = $region120
              $region125: #{operation_net_forward.1} parent=117 // loop_exit
                _
            $region118: #{operation_net_forward.1} parent=109 // pred_fallthru
              _
          $region110: #{operation_net_forward.1} parent=105 // pred_fallthru
            _
          %1516 = vnop
        $region106: #{operation_net_forward.1} parent=97 // pred_fallthru
          _
        // Predicated region
        $region141: #{operation_net_forward.1} parent=97 // pred_check
          %p1517 = pneg %p323
        $region142: #{operation_net_forward.1} parent=97 // pred_check_branch
          %1519 = sbr.rel (%p1517) target = $region144
        $region143: #{operation_net_forward.1} parent=97 // pred_region
          %s1520 = smul.addr %s29, 4
          %s1521 = sadd.s32 %s30, %s1520
          %s1522 = smul.addr %s1521, 8
          %s1523 = scalar_lea.vmem %s12, %s1522
          // Predicated region
          $region145: #{operation_net_forward.1} parent=143 // pred_check
            _
          $region146: #{operation_net_forward.1} parent=143 // pred_check_branch
            %1525 = sbr.rel (0) target = $region148
          $region147: #{operation_net_forward.1} parent=143 // pred_region
            // Predicated region
            $region149: #{operation_net_forward.1} parent=147 // pred_check
              _
            $region150: #{operation_net_forward.1} parent=147 // pred_check_branch
              %1527 = sbr.rel (0) target = $region152
            $region151: #{operation_net_forward.1} parent=147 // pred_region
              // Predicated region
              $region164: #{operation_net_forward.1} parent=151 // pred_check
                _
              $region165: #{operation_net_forward.1} parent=151 // pred_check_branch
                %1545 = sbr.rel (0) target = $region167
              $region166: #{operation_net_forward.1} parent=151 // pred_region
                loop: start=0, step=1, limit=1
                $region168: #{operation_net_forward.1} parent=166 // loop_pre_header
                  _
                $region169: #{operation_net_forward.1} parent=166 // loop_header
                  %s1547 = sphi 0, %s1551
                  %p1548 = scmp.ge.s32.totalorder %s1547, 1
                  %s1552 = sphi %s1468, %s1468
                  %s1553 = sphi %s1523, %s1523
                $region170: #{operation_net_forward.1} parent=166 // loop_header_branch
                  %1550 = sbr.rel (%p1548) target = $region174
                $region171: #{operation_net_forward.1} parent=166 // loop_body
                  %v1554 = vld [vmem:[%s1552] sm:$0xff]
                  %1555 = vst [vmem:[%s1553] sm:$0xff] %v1554
                  %v1556 = vld [vmem:[%s1552 + $0x8] sm:$0xff]
                  %1557 = vst [vmem:[%s1553 + $0x10] sm:$0xff] %v1556
                $region172: #{operation_net_forward.1} parent=166 // loop_footer
                  %s1551 = sadd.s32 1, %s1547
                $region173: #{operation_net_forward.1} parent=166 // loop_footer_branch
                  %1546 = sbr.rel target = $region169
                $region174: #{operation_net_forward.1} parent=166 // loop_exit
                  _
              $region167: #{operation_net_forward.1} parent=151 // pred_fallthru
                _
              // Predicated region
              $region175: #{operation_net_forward.1} parent=151 // pred_check
                _
              $region176: #{operation_net_forward.1} parent=151 // pred_check_branch
                %1559 = sbr.rel target = $region178
              $region177: #{operation_net_forward.1} parent=151 // pred_region
                _
              $region178: #{operation_net_forward.1} parent=151 // pred_fallthru
                _
            $region152: #{operation_net_forward.1} parent=147 // pred_fallthru
              _
            // Predicated region
            $region153: #{operation_net_forward.1} parent=147 // pred_check
              _
            $region154: #{operation_net_forward.1} parent=147 // pred_check_branch
              %1529 = sbr.rel target = $region156
            $region155: #{operation_net_forward.1} parent=147 // pred_region
              %s1531 = ssub.s32 256, 1
              loop: start=0, step=1, limit=1
              $region157: #{operation_net_forward.1} parent=155 // loop_pre_header
                _
              $region158: #{operation_net_forward.1} parent=155 // loop_header
                %s1533 = sphi 0, %s1537
                %p1534 = scmp.ge.s32.totalorder %s1533, 1
                %s1538 = sphi %s1468, %s1468
                %s1539 = sphi %s1523, %s1523
              $region159: #{operation_net_forward.1} parent=155 // loop_header_branch
                %1536 = sbr.rel (%p1534) target = $region163
              $region160: #{operation_net_forward.1} parent=155 // loop_body
                %v1540 = vld [vmem:[%s1538] sm:%s1531]
                %1541 = vst [vmem:[%s1539] sm:%s1531] %v1540
                %v1542 = vld [vmem:[%s1538 + $0x8] sm:%s1531]
                %1543 = vst [vmem:[%s1539 + $0x10] sm:%s1531] %v1542
              $region161: #{operation_net_forward.1} parent=155 // loop_footer
                %s1537 = sadd.s32 1, %s1533
              $region162: #{operation_net_forward.1} parent=155 // loop_footer_branch
                %1532 = sbr.rel target = $region158
              $region163: #{operation_net_forward.1} parent=155 // loop_exit
                _
            $region156: #{operation_net_forward.1} parent=147 // pred_fallthru
              _
          $region148: #{operation_net_forward.1} parent=143 // pred_fallthru
            _
          %1560 = vnop
        $region144: #{operation_net_forward.1} parent=97 // pred_fallthru
          _
        // Predicated region
        $region179: #{operation_net_forward.1} parent=97 // pred_check
          %p1561 = pneg %p351
        $region180: #{operation_net_forward.1} parent=97 // pred_check_branch
          %1563 = sbr.rel (%p1561) target = $region182
        $region181: #{operation_net_forward.1} parent=97 // pred_region
          %s1564 = smul.addr %s29, 4
          %s1565 = sadd.s32 %s30, %s1564
          %s1566 = smul.addr %s1565, 8
          %s1567 = scalar_lea.vmem %s13, %s1566
          // Predicated region
          $region183: #{operation_net_forward.1} parent=181 // pred_check
            _
          $region184: #{operation_net_forward.1} parent=181 // pred_check_branch
            %1569 = sbr.rel (0) target = $region186
          $region185: #{operation_net_forward.1} parent=181 // pred_region
            // Predicated region
            $region187: #{operation_net_forward.1} parent=185 // pred_check
              _
            $region188: #{operation_net_forward.1} parent=185 // pred_check_branch
              %1571 = sbr.rel (0) target = $region190
            $region189: #{operation_net_forward.1} parent=185 // pred_region
              // Predicated region
              $region202: #{operation_net_forward.1} parent=189 // pred_check
                _
              $region203: #{operation_net_forward.1} parent=189 // pred_check_branch
                %1589 = sbr.rel (0) target = $region205
              $region204: #{operation_net_forward.1} parent=189 // pred_region
                loop: start=0, step=1, limit=1
                $region206: #{operation_net_forward.1} parent=204 // loop_pre_header
                  _
                $region207: #{operation_net_forward.1} parent=204 // loop_header
                  %s1591 = sphi 0, %s1595
                  %p1592 = scmp.ge.s32.totalorder %s1591, 1
                  %s1596 = sphi %s1472, %s1472
                  %s1597 = sphi %s1567, %s1567
                $region208: #{operation_net_forward.1} parent=204 // loop_header_branch
                  %1594 = sbr.rel (%p1592) target = $region212
                $region209: #{operation_net_forward.1} parent=204 // loop_body
                  %v1598 = vld [vmem:[%s1596] sm:$0xff]
                  %1599 = vst [vmem:[%s1597] sm:$0xff] %v1598
                  %v1600 = vld [vmem:[%s1596 + $0x8] sm:$0xff]
                  %1601 = vst [vmem:[%s1597 + $0x10] sm:$0xff] %v1600
                $region210: #{operation_net_forward.1} parent=204 // loop_footer
                  %s1595 = sadd.s32 1, %s1591
                $region211: #{operation_net_forward.1} parent=204 // loop_footer_branch
                  %1590 = sbr.rel target = $region207
                $region212: #{operation_net_forward.1} parent=204 // loop_exit
                  _
              $region205: #{operation_net_forward.1} parent=189 // pred_fallthru
                _
              // Predicated region
              $region213: #{operation_net_forward.1} parent=189 // pred_check
                _
              $region214: #{operation_net_forward.1} parent=189 // pred_check_branch
                %1603 = sbr.rel target = $region216
              $region215: #{operation_net_forward.1} parent=189 // pred_region
                _
              $region216: #{operation_net_forward.1} parent=189 // pred_fallthru
                _
            $region190: #{operation_net_forward.1} parent=185 // pred_fallthru
              _
            // Predicated region
            $region191: #{operation_net_forward.1} parent=185 // pred_check
              _
            $region192: #{operation_net_forward.1} parent=185 // pred_check_branch
              %1573 = sbr.rel target = $region194
            $region193: #{operation_net_forward.1} parent=185 // pred_region
              %s1575 = ssub.s32 256, 1
              loop: start=0, step=1, limit=1
              $region195: #{operation_net_forward.1} parent=193 // loop_pre_header
                _
              $region196: #{operation_net_forward.1} parent=193 // loop_header
                %s1577 = sphi 0, %s1581
                %p1578 = scmp.ge.s32.totalorder %s1577, 1
                %s1582 = sphi %s1472, %s1472
                %s1583 = sphi %s1567, %s1567
              $region197: #{operation_net_forward.1} parent=193 // loop_header_branch
                %1580 = sbr.rel (%p1578) target = $region201
              $region198: #{operation_net_forward.1} parent=193 // loop_body
                %v1584 = vld [vmem:[%s1582] sm:%s1575]
                %1585 = vst [vmem:[%s1583] sm:%s1575] %v1584
                %v1586 = vld [vmem:[%s1582 + $0x8] sm:%s1575]
                %1587 = vst [vmem:[%s1583 + $0x10] sm:%s1575] %v1586
              $region199: #{operation_net_forward.1} parent=193 // loop_footer
                %s1581 = sadd.s32 1, %s1577
              $region200: #{operation_net_forward.1} parent=193 // loop_footer_branch
                %1576 = sbr.rel target = $region196
              $region201: #{operation_net_forward.1} parent=193 // loop_exit
                _
            $region194: #{operation_net_forward.1} parent=185 // pred_fallthru
              _
          $region186: #{operation_net_forward.1} parent=181 // pred_fallthru
            _
          %1604 = vnop
        $region182: #{operation_net_forward.1} parent=97 // pred_fallthru
          _
      $region98: #{operation_net_forward.1} parent=5 // pred_fallthru
        _
      %p1605 = scmp.le.s32.totalorder 2, %s20
      // Predicated region
      $region217: #{operation_net_forward.1} parent=5 // pred_check
        %p1606 = pneg %p1605
      $region218: #{operation_net_forward.1} parent=5 // pred_check_branch
        %1608 = sbr.rel (%p1606) target = $region220
      $region219: #{operation_net_forward.1} parent=5 // pred_region
        %s1609 = ssub.s32 %s20, 2
        // Predicated region
        $region221: #{operation_net_forward.1} parent=219 // pred_check
          %p1610 = pneg %p301
        $region222: #{operation_net_forward.1} parent=219 // pred_check_branch
          %1612 = sbr.rel (%p1610) target = $region224
        $region223: #{operation_net_forward.1} parent=219 // pred_region
          %s1613 = sand.u32 %s286, 1
          %s1614 = sand.u32 %s286, 1
          %s1615 = smul.addr %s1614, 16
          %s1616 = scalar_lea.vmem [#allocation3], %s1615
        $region224: #{operation_net_forward.1} parent=219 // pred_fallthru
          _
        // Predicated region
        $region225: #{operation_net_forward.1} parent=219 // pred_check
          %p1617 = pneg %p329
        $region226: #{operation_net_forward.1} parent=219 // pred_check_branch
          %1619 = sbr.rel (%p1617) target = $region228
        $region227: #{operation_net_forward.1} parent=219 // pred_region
          %s1620 = sand.u32 %s314, 1
          %s1621 = sand.u32 %s314, 1
          %s1622 = smul.addr %s1621, 16
          %s1623 = scalar_lea.vmem [#allocation4], %s1622
        $region228: #{operation_net_forward.1} parent=219 // pred_fallthru
          _
        // Predicated region
        $region229: #{operation_net_forward.1} parent=219 // pred_check
          %p1624 = pneg %p357
        $region230: #{operation_net_forward.1} parent=219 // pred_check_branch
          %1626 = sbr.rel (%p1624) target = $region232
        $region231: #{operation_net_forward.1} parent=219 // pred_region
          %s1627 = sand.u32 %s342, 1
          %s1628 = sand.u32 %s342, 1
          %s1629 = smul.addr %s1628, 16
          %s1630 = scalar_lea.vmem [#allocation5], %s1629
        $region232: #{operation_net_forward.1} parent=219 // pred_fallthru
          _
      $region220: #{operation_net_forward.1} parent=5 // pred_fallthru
        _
    $region6: #{operation_net_forward.1} parent=1 // loop_footer
      %s24 = sadd.s32 1, %s20
    $region7: #{operation_net_forward.1} parent=1 // loop_footer_branch
      %19 = sbr.rel target = $region3
    $region8: #{operation_net_forward.1} parent=1 // loop_exit
      _

</llo_original>
